<compile_context>
chip_gen: v7x
topology: tpu7x:2x2x1
jax: 0.10.0
libtpu: 0.0.40
codegen_flags: <defaults>
</compile_context>

<pallas_src>
import functools

import numpy as np
import jax
import jax.numpy as jnp
from jax.experimental import pallas as pl
from jax.experimental.pallas import tpu as pltpu

SAMPLE_RATE = 16000
NFFT = 400
NFILT = 26
NFREQ = NFFT // 2 + 1          # 201 true frequency bins
LN_EPS = 1e-5                  # torch.nn.LayerNorm default eps
NFILT_PAD = 128                # 26 -> 128: lane-dense MXU output / stat lanes
NCORES = 2                     # leading "parallel" grid axis (v7x megacore)


def _round_up(x, m):
    return (x + m - 1) // m * m


def make_mel_fbank(sample_rate=SAMPLE_RATE, nfft=NFFT, nfilt=NFILT):
    """Exact replica of the numpy mel-filterbank construction in Fbank.forward."""
    low_freq_mel = 0.0
    high_freq_mel = 2595.0 * np.log10(1 + sample_rate / 2 / 700)
    mel_points = np.linspace(low_freq_mel, high_freq_mel, nfilt + 2)
    hz_points = 700.0 * (10 ** (mel_points / 2595.0) - 1)
    bins = np.floor((nfft + 1) * hz_points / sample_rate)
    fbank = np.zeros((nfilt, int(np.floor(nfft / 2 + 1))))
    for m in range(1, nfilt + 1):
        f_m_minus = int(bins[m - 1])
        f_m = int(bins[m])
        f_m_plus = int(bins[m + 1])
        for k in range(f_m_minus, f_m):
            fbank[m - 1, k] = (k - bins[m - 1]) / (bins[m] - bins[m - 1])
        for k in range(f_m, f_m_plus):
            fbank[m - 1, k] = (bins[m + 1] - k) / (bins[m + 1] - bins[m])
    return fbank.astype(np.float32)      # (nfilt, NFREQ)


def prepare_params(w, b, fbank):
    """One-time host-side prep: W/bias at their true (F, F)/(1, F) shapes (no
    activation padding needed any more); fbank^T padded to 128 lanes + bf16."""
    w = np.asarray(w, np.float32)                      # (F, F)
    b = np.asarray(b, np.float32).reshape(1, -1)       # (1, F)
    fbank = np.asarray(fbank, np.float32)              # (nfilt, F)
    nfilt, F = fbank.shape
    fbt = np.zeros((F, NFILT_PAD), np.float32)
    fbt[:, :nfilt] = fbank.T
    return (jnp.asarray(w).astype(jnp.bfloat16),       # (F, F)         bf16
            jnp.asarray(b),                            # (1, F)         f32
            jnp.asarray(fbt).astype(jnp.bfloat16))     # (F, NFILT_PAD) bf16


def combined_forward(noisy, clean, w_bf16, b_f32, fbt_bf16,
                     nfilt_true=NFILT, without_asr=False, tile_n_max=2048):
    """noisy/clean: (B, T, F) f32 power frames.  Returns (SEloss, ASRloss_proxy)."""
    B, T, F = noisy.shape
    N = B * T
    nfilt_pad = fbt_bf16.shape[1]

    # Free reshapes (contiguous), NO padding copies.
    noisy2 = noisy.reshape(N, F).astype(jnp.float32)
    clean2 = clean.reshape(N, F).astype(jnp.float32)

    tile_n = min(tile_n_max, _round_up(N, 8))
    num_tiles = pl.cdiv(N, tile_n)
    ncores = NCORES if num_tiles >= 2 else 1
    steps = pl.cdiv(num_tiles, ncores)          # row-tiles per core
    last_tile = num_tiles - 1

    # ------------------------- kernel (single pass) ------------------------- #
    def kernel(noisy_ref, clean_ref, w_ref, b_ref, fbt_ref,
               sesq_ref, se_ref, se2_ref, sc_ref, sc2_ref, sec_ref):
        c = pl.program_id(0)                     # core slice of the row stream
        i = pl.program_id(1)                     # step within the slice

        @pl.when(i == 0)
        def _init():                             # per-core accumulator init
            sesq_ref[...] = jnp.zeros_like(sesq_ref)
            se_ref[...] = jnp.zeros_like(se_ref)
            se2_ref[...] = jnp.zeros_like(se2_ref)
            sc_ref[...] = jnp.zeros_like(sc_ref)
            sc2_ref[...] = jnp.zeros_like(sc2_ref)
            sec_ref[...] = jnp.zeros_like(sec_ref)

        noisy = noisy_ref[...]                   # (tile_n, F) f32
        clean = clean_ref[...]                   # (tile_n, F) f32

        # SE model: per-frame linear enhancement (bf16 MXU inputs, f32 acc).
        enhanced = jnp.dot(noisy.astype(jnp.bfloat16), w_ref[...],
                           preferred_element_type=jnp.float32) + b_ref[...]

        # Row-validity mask: ragged last tile (undefined DMA padding rows) and
        # the clamped duplicate tile on the odd-count core both land at
        # row >= N, so a single where()-style mask covers everything (NaN-safe).
        t = c * steps + i                        # logical row-tile index
        row = t * tile_n + jax.lax.broadcasted_iota(jnp.int32, (tile_n, 1), 0)
        valid = row < N                          # (tile_n, 1) bool

        # SE criterion: masked squared-error column sums.
        d = enhanced - clean
        d2 = jnp.where(valid, d * d, 0.0)
        sesq_ref[...] += jnp.sum(d2, axis=0, keepdims=True)[None]

        # Fbank matmuls: both share the resident fbank^T RHS on the MXU.
        fbt = fbt_ref[...]                       # (F, NFILT_PAD) bf16
        efb = jnp.dot(enhanced.astype(jnp.bfloat16), fbt,
                      preferred_element_type=jnp.float32)
        cfb = jnp.dot(clean.astype(jnp.bfloat16), fbt,
                      preferred_element_type=jnp.float32)
        efb = jnp.where(valid, efb, 0.0)
        cfb = jnp.where(valid, cfb, 0.0)

        # Per-filter sufficient statistics over the full B*T axis (these fully
        # determine the per-filter LayerNorm + the proxy ASR MSE in closed form).
        se_ref[...] += jnp.sum(efb, axis=0, keepdims=True)[None]
        se2_ref[...] += jnp.sum(efb * efb, axis=0, keepdims=True)[None]
        sc_ref[...] += jnp.sum(cfb, axis=0, keepdims=True)[None]
        sc2_ref[...] += jnp.sum(cfb * cfb, axis=0, keepdims=True)[None]
        sec_ref[...] += jnp.sum(efb * cfb, axis=0, keepdims=True)[None]

    # ------------------------------ specs ----------------------------------- #
    def row_map(c, i):                           # clamp duplicate tiles in-bounds
        return (jnp.minimum(c * steps + i, last_tile), 0)

    const_map = lambda c, i: (0, 0)              # resident constants
    acc_map = lambda c, i: (c, 0, 0)             # per-core accumulator slabs

    in_specs = [
        pl.BlockSpec((tile_n, F), row_map),          # noisy tile (f32)
        pl.BlockSpec((tile_n, F), row_map),          # clean tile (f32)
        pl.BlockSpec((F, F), const_map),             # W      (bf16, resident)
        pl.BlockSpec((1, F), const_map),             # bias   (f32,  resident)
        pl.BlockSpec((F, nfilt_pad), const_map),     # fbank^T(bf16, resident)
    ]
    out_shape = (
        jax.ShapeDtypeStruct((ncores, 1, F), jnp.float32),           # SE sq-err col sums
        jax.ShapeDtypeStruct((ncores, 1, nfilt_pad), jnp.float32),   # sum(efb)
        jax.ShapeDtypeStruct((ncores, 1, nfilt_pad), jnp.float32),   # sum(efb^2)
        jax.ShapeDtypeStruct((ncores, 1, nfilt_pad), jnp.float32),   # sum(cfb)
        jax.ShapeDtypeStruct((ncores, 1, nfilt_pad), jnp.float32),   # sum(cfb^2)
        jax.ShapeDtypeStruct((ncores, 1, nfilt_pad), jnp.float32),   # sum(efb*cfb)
    )
    out_specs = (
        pl.BlockSpec((1, 1, F), acc_map),
        pl.BlockSpec((1, 1, nfilt_pad), acc_map),
        pl.BlockSpec((1, 1, nfilt_pad), acc_map),
        pl.BlockSpec((1, 1, nfilt_pad), acc_map),
        pl.BlockSpec((1, 1, nfilt_pad), acc_map),
        pl.BlockSpec((1, 1, nfilt_pad), acc_map),
    )

    rows = ncores * steps * tile_n
    flops = 2 * rows * F * F + 4 * rows * F * nfilt_pad + 12 * rows * F
    bytes_accessed = (2 * rows * F * 4
                      + (F * F + F * nfilt_pad) * 2 + F * 4
                      + ncores * (F + 5 * nfilt_pad) * 4)

    sesq, s_e, s_e2, s_c, s_c2, s_ec = pl.pallas_call(
        kernel,
        out_shape=out_shape,
        grid=(ncores, steps),
        in_specs=in_specs,
        out_specs=out_specs,
        compiler_params=pltpu.CompilerParams(
            dimension_semantics=("parallel", "arbitrary"),
            vmem_limit_bytes=48 * 1024 * 1024),
        cost_estimate=pl.CostEstimate(flops=flops, transcendentals=0,
                                      bytes_accessed=bytes_accessed),
    )(noisy2, clean2, w_bf16, b_f32, fbt_bf16)

    # ------------------- tiny finalization (plain jnp) ---------------------- #
    n = jnp.float32(N)
    se_loss = jnp.sum(sesq) / (n * jnp.float32(F))

    Se = jnp.sum(s_e, axis=(0, 1))              # (nfilt_pad,)
    Se2 = jnp.sum(s_e2, axis=(0, 1))
    Sc = jnp.sum(s_c, axis=(0, 1))
    Sc2 = jnp.sum(s_c2, axis=(0, 1))
    Sec = jnp.sum(s_ec, axis=(0, 1))

    mu_e, mu_c = Se / n, Sc / n
    var_e = Se2 / n - mu_e * mu_e               # biased var, as in torch LayerNorm
    var_c = Sc2 / n - mu_c * mu_c
    cov = Sec / n - mu_e * mu_c
    inv_e = jax.lax.rsqrt(var_e + LN_EPS)
    inv_c = jax.lax.rsqrt(var_c + LN_EPS)

    # TODO(synk): real ASRmodel is a torch.load()'d checkpoint (no Pallas
    # equivalent); proxy = MSE between the two per-filter-normalized fbank maps,
    # in closed form:  sum_rows (e_n - c_n)^2 per filter.
    per_filter = n * (var_e * inv_e * inv_e + var_c * inv_c * inv_c
                      - 2.0 * cov * inv_e * inv_c)
    asr_loss = jnp.sum(per_filter[:nfilt_true]) / (n * jnp.float32(nfilt_true))
    if without_asr:
        asr_loss = jnp.zeros((), jnp.float32)
    return se_loss, asr_loss


if __name__ == "__main__":
    B, T, F = 2, 300, NFREQ                      # N = 600 frames (small test)

    key = jax.random.PRNGKey(0)
    k_noisy, k_clean, k_w, k_b = jax.random.split(key, 4)

    # power-spectrum-like non-negative inputs
    noisy = jax.random.uniform(k_noisy, (B, T, F), jnp.float32, 0.0, 1.0)
    clean = jax.random.uniform(k_clean, (B, T, F), jnp.float32, 0.0, 1.0)

    # deterministic synthetic SE-model parameters
    w = (jnp.eye(F, dtype=jnp.float32)
         + 0.02 * jax.random.normal(k_w, (F, F), jnp.float32))
    b = 0.01 * jax.random.normal(k_b, (1, F), jnp.float32)

    fbank = make_mel_fbank()                     # (26, 201) numpy
    w_bf, b_f, fbt_bf = prepare_params(w, b, fbank)

    # tile_n_max=256 so the test exercises multiple row tiles, the ragged last
    # tile and the clamped/masked duplicate tile on the second core slice.
    fwd = jax.jit(functools.partial(combined_forward, tile_n_max=256))
    se_loss, asr_loss = fwd(noisy, clean, w_bf, b_f, fbt_bf)
    jax.block_until_ready((se_loss, asr_loss))

    # ---- pure-JAX reference (same bf16 casts) for a correctness self-check ----
    N = B * T
    x2 = noisy.reshape(N, F)
    c2 = clean.reshape(N, F)
    enh = jnp.dot(x2.astype(jnp.bfloat16), w_bf,
                  preferred_element_type=jnp.float32) + b_f
    se_ref = jnp.mean((enh - c2) ** 2)
    efb = jnp.dot(enh.astype(jnp.bfloat16), fbt_bf,
                  preferred_element_type=jnp.float32)[:, :NFILT]
    cfb = jnp.dot(c2.astype(jnp.bfloat16), fbt_bf,
                  preferred_element_type=jnp.float32)[:, :NFILT]

    def _ln(f):  # per-filter LayerNorm over all B*T frames (gamma=1, beta=0)
        mu = jnp.mean(f, axis=0)
        var = jnp.mean((f - mu) ** 2, axis=0)
        return (f - mu) * jax.lax.rsqrt(var + LN_EPS)

    asr_ref = jnp.mean((_ln(efb) - _ln(cfb)) ** 2)

    assert bool(jnp.isfinite(se_loss)) and bool(jnp.isfinite(asr_loss))
    assert bool(jnp.allclose(se_loss, se_ref, rtol=2e-2, atol=1e-5))
    assert bool(jnp.allclose(asr_loss, asr_ref, rtol=2e-2, atol=1e-4))
    print("KERNEL_OK")
</pallas_src>

<mosaic_0001>
module attributes {stable_mosaic.version = 11 : i64} {
  func.func @kernel(%arg0: i32, %arg1: i32, %arg2: memref<256x201xf32, #tpu.memory_space<vmem>>, %arg3: memref<256x201xf32, #tpu.memory_space<vmem>>, %arg4: memref<201x201xbf16, #tpu.memory_space<vmem>>, %arg5: memref<1x201xf32, #tpu.memory_space<vmem>>, %arg6: memref<201x128xbf16, #tpu.memory_space<vmem>>, %arg7: memref<1x1x201xf32, #tpu.memory_space<vmem>>, %arg8: memref<1x1x128xf32, #tpu.memory_space<vmem>>, %arg9: memref<1x1x128xf32, #tpu.memory_space<vmem>>, %arg10: memref<1x1x128xf32, #tpu.memory_space<vmem>>, %arg11: memref<1x1x128xf32, #tpu.memory_space<vmem>>, %arg12: memref<1x1x128xf32, #tpu.memory_space<vmem>>) attributes {dimension_semantics = [#tpu.dimension_semantics<parallel>, #tpu.dimension_semantics<arbitrary>], iteration_bounds = array<i64: 2, 2>, scalar_prefetch = 0 : i64, scratch_operands = 0 : i64, tpu.core_type = #tpu.core_type<tc>, window_params = [{transform_indices = @transform_0, window_bounds = array<i64: 256, 201>}, {transform_indices = @transform_1, window_bounds = array<i64: 256, 201>}, {pipeline_mode = #tpu.pipeline_mode<synchronous>, transform_indices = @transform_2, window_bounds = array<i64: 201, 201>}, {pipeline_mode = #tpu.pipeline_mode<synchronous>, transform_indices = @transform_3, window_bounds = array<i64: 1, 201>}, {pipeline_mode = #tpu.pipeline_mode<synchronous>, transform_indices = @transform_4, window_bounds = array<i64: 201, 128>}, {transform_indices = @transform_5, window_bounds = array<i64: 1, 1, 201>}, {transform_indices = @transform_6, window_bounds = array<i64: 1, 1, 128>}, {transform_indices = @transform_7, window_bounds = array<i64: 1, 1, 128>}, {transform_indices = @transform_8, window_bounds = array<i64: 1, 1, 128>}, {transform_indices = @transform_9, window_bounds = array<i64: 1, 1, 128>}, {transform_indices = @transform_10, window_bounds = array<i64: 1, 1, 128>}]} {
    %c0_i32 = arith.constant 0 : i32
    %0 = arith.cmpi eq, %arg1, %c0_i32 : i32
    %1 = arith.extui %0 : i1 to i32
    %c0_i32_0 = arith.constant 0 : i32
    %2 = arith.cmpi ne, %1, %c0_i32_0 : i32
    scf.if %2 {
      %cst_57 = arith.constant 0.000000e+00 : f32
      %77 = vector.broadcast %cst_57 : f32 to vector<1x1x201xf32>
      %c0_58 = arith.constant 0 : index
      %c0_59 = arith.constant 0 : index
      %c0_60 = arith.constant 0 : index
      %78 = vector.load %arg7[%c0_58, %c0_59, %c0_60] : memref<1x1x201xf32, #tpu.memory_space<vmem>>, vector<1x1x201xf32>
      tpu.vector_store %arg7[%c0_58, %c0_59, %c0_60], %77 {strides = array<i32>} : memref<1x1x201xf32, #tpu.memory_space<vmem>>, vector<1x1x201xf32>,
      %cst_61 = arith.constant 0.000000e+00 : f32
      %79 = vector.broadcast %cst_61 : f32 to vector<1x1x128xf32>
      %c0_62 = arith.constant 0 : index
      %c0_63 = arith.constant 0 : index
      %c0_64 = arith.constant 0 : index
      %80 = vector.load %arg8[%c0_62, %c0_63, %c0_64] : memref<1x1x128xf32, #tpu.memory_space<vmem>>, vector<1x1x128xf32>
      tpu.vector_store %arg8[%c0_62, %c0_63, %c0_64], %79 {strides = array<i32>} : memref<1x1x128xf32, #tpu.memory_space<vmem>>, vector<1x1x128xf32>,
      %cst_65 = arith.constant 0.000000e+00 : f32
      %81 = vector.broadcast %cst_65 : f32 to vector<1x1x128xf32>
      %c0_66 = arith.constant 0 : index
      %c0_67 = arith.constant 0 : index
      %c0_68 = arith.constant 0 : index
      %82 = vector.load %arg9[%c0_66, %c0_67, %c0_68] : memref<1x1x128xf32, #tpu.memory_space<vmem>>, vector<1x1x128xf32>
      tpu.vector_store %arg9[%c0_66, %c0_67, %c0_68], %81 {strides = array<i32>} : memref<1x1x128xf32, #tpu.memory_space<vmem>>, vector<1x1x128xf32>,
      %cst_69 = arith.constant 0.000000e+00 : f32
      %83 = vector.broadcast %cst_69 : f32 to vector<1x1x128xf32>
      %c0_70 = arith.constant 0 : index
      %c0_71 = arith.constant 0 : index
      %c0_72 = arith.constant 0 : index
      %84 = vector.load %arg10[%c0_70, %c0_71, %c0_72] : memref<1x1x128xf32, #tpu.memory_space<vmem>>, vector<1x1x128xf32>
      tpu.vector_store %arg10[%c0_70, %c0_71, %c0_72], %83 {strides = array<i32>} : memref<1x1x128xf32, #tpu.memory_space<vmem>>, vector<1x1x128xf32>,
      %cst_73 = arith.constant 0.000000e+00 : f32
      %85 = vector.broadcast %cst_73 : f32 to vector<1x1x128xf32>
      %c0_74 = arith.constant 0 : index
      %c0_75 = arith.constant 0 : index
      %c0_76 = arith.constant 0 : index
      %86 = vector.load %arg11[%c0_74, %c0_75, %c0_76] : memref<1x1x128xf32, #tpu.memory_space<vmem>>, vector<1x1x128xf32>
      tpu.vector_store %arg11[%c0_74, %c0_75, %c0_76], %85 {strides = array<i32>} : memref<1x1x128xf32, #tpu.memory_space<vmem>>, vector<1x1x128xf32>,
      %cst_77 = arith.constant 0.000000e+00 : f32
      %87 = vector.broadcast %cst_77 : f32 to vector<1x1x128xf32>
      %c0_78 = arith.constant 0 : index
      %c0_79 = arith.constant 0 : index
      %c0_80 = arith.constant 0 : index
      %88 = vector.load %arg12[%c0_78, %c0_79, %c0_80] : memref<1x1x128xf32, #tpu.memory_space<vmem>>, vector<1x1x128xf32>
      tpu.vector_store %arg12[%c0_78, %c0_79, %c0_80], %87 {strides = array<i32>} : memref<1x1x128xf32, #tpu.memory_space<vmem>>, vector<1x1x128xf32>,
    } else {
    }
    %c0 = arith.constant 0 : index
    %c0_1 = arith.constant 0 : index
    %3 = vector.load %arg2[%c0, %c0_1] : memref<256x201xf32, #tpu.memory_space<vmem>>, vector<256x201xf32>
    %c0_2 = arith.constant 0 : index
    %c0_3 = arith.constant 0 : index
    %4 = vector.load %arg3[%c0_2, %c0_3] : memref<256x201xf32, #tpu.memory_space<vmem>>, vector<256x201xf32>
    %5 = arith.truncf %3 : vector<256x201xf32> to vector<256x201xbf16>
    %c0_4 = arith.constant 0 : index
    %c0_5 = arith.constant 0 : index
    %6 = vector.load %arg4[%c0_4, %c0_5] : memref<201x201xbf16, #tpu.memory_space<vmem>>, vector<201x201xbf16>
    %cst = arith.constant dense<0.000000e+00> : vector<256x201xf32>
    %7 = tpu.matmul %5, %6, %cst {dimension_numbers = #tpu.dot_dimension_numbers<[1], [0], [0], [1], [0, 0, 1, 1], [], []>} : vector<256x201xbf16>, vector<201x201xbf16>, vector<256x201xf32> -> vector<256x201xf32>
    %c0_6 = arith.constant 0 : index
    %c0_7 = arith.constant 0 : index
    %8 = vector.load %arg5[%c0_6, %c0_7] : memref<1x201xf32, #tpu.memory_space<vmem>>, vector<1x201xf32>
    %9 = vector.broadcast %8 : vector<1x201xf32> to vector<256x201xf32>
    %10 = arith.addf %7, %9 : vector<256x201xf32>
    %c2_i32 = arith.constant 2 : i32
    %11 = arith.muli %arg0, %c2_i32 : i32
    %12 = arith.addi %11, %arg1 : i32
    %c256_i32 = arith.constant 256 : i32
    %13 = arith.muli %12, %c256_i32 : i32
    %14 = tpu.iota {dimensions = array<i32: 0>} : vector<256x1xi32>
    %15 = vector.broadcast %13 : i32 to vector<256x1xi32>
    %16 = arith.addi %15, %14 : vector<256x1xi32>
    %c600_i32 = arith.constant 600 : i32
    %17 = vector.broadcast %c600_i32 : i32 to vector<256x1xi32>
    %18 = arith.cmpi slt, %16, %17 : vector<256x1xi32>
    %19 = arith.subf %10, %4 : vector<256x201xf32>
    %20 = arith.mulf %19, %19 : vector<256x201xf32>
    %cst_8 = arith.constant 0.000000e+00 : f32
    %21 = vector.shape_cast %18 : vector<256x1xi1> to vector<256x1xi1>
    %22 = vector.broadcast %21 : vector<256x1xi1> to vector<256x201xi1>
    %23 = vector.broadcast %cst_8 : f32 to vector<256x201xf32>
    %24 = arith.select %22, %20, %23 : vector<256x201xi1>, vector<256x201xf32>
    %c0_9 = arith.constant 0 : index
    %c0_10 = arith.constant 0 : index
    %c0_11 = arith.constant 0 : index
    %25 = vector.load %arg7[%c0_9, %c0_10, %c0_11] : memref<1x1x201xf32, #tpu.memory_space<vmem>>, vector<1x1x201xf32>
    %cst_12 = arith.constant dense<0.000000e+00> : vector<201xf32>
    %26 = vector.multi_reduction <add>, %24, %cst_12 [0] : vector<256x201xf32> to vector<201xf32>
    %27 = vector.shape_cast %26 : vector<201xf32> to vector<1x201xf32>
    %28 = vector.shape_cast %27 : vector<1x201xf32> to vector<1x1x201xf32>
    %29 = arith.addf %25, %28 : vector<1x1x201xf32>
    %c0_13 = arith.constant 0 : index
    %c0_14 = arith.constant 0 : index
    %c0_15 = arith.constant 0 : index
    %30 = vector.load %arg7[%c0_13, %c0_14, %c0_15] : memref<1x1x201xf32, #tpu.memory_space<vmem>>, vector<1x1x201xf32>
    tpu.vector_store %arg7[%c0_13, %c0_14, %c0_15], %29 {strides = array<i32>} : memref<1x1x201xf32, #tpu.memory_space<vmem>>, vector<1x1x201xf32>,
    %c0_16 = arith.constant 0 : index
    %c0_17 = arith.constant 0 : index
    %31 = vector.load %arg6[%c0_16, %c0_17] : memref<201x128xbf16, #tpu.memory_space<vmem>>, vector<201x128xbf16>
    %32 = arith.truncf %10 : vector<256x201xf32> to vector<256x201xbf16>
    %cst_18 = arith.constant dense<0.000000e+00> : vector<256x128xf32>
    %33 = tpu.matmul %32, %31, %cst_18 {dimension_numbers = #tpu.dot_dimension_numbers<[1], [0], [0], [1], [0, 0, 1, 1], [], []>} : vector<256x201xbf16>, vector<201x128xbf16>, vector<256x128xf32> -> vector<256x128xf32>
    %34 = arith.truncf %4 : vector<256x201xf32> to vector<256x201xbf16>
    %cst_19 = arith.constant dense<0.000000e+00> : vector<256x128xf32>
    %35 = tpu.matmul %34, %31, %cst_19 {dimension_numbers = #tpu.dot_dimension_numbers<[1], [0], [0], [1], [0, 0, 1, 1], [], []>} : vector<256x201xbf16>, vector<201x128xbf16>, vector<256x128xf32> -> vector<256x128xf32>
    %cst_20 = arith.constant 0.000000e+00 : f32
    %36 = vector.shape_cast %18 : vector<256x1xi1> to vector<256x1xi1>
    %37 = vector.broadcast %36 : vector<256x1xi1> to vector<256x128xi1>
    %38 = vector.broadcast %cst_20 : f32 to vector<256x128xf32>
    %39 = arith.select %37, %33, %38 : vector<256x128xi1>, vector<256x128xf32>
    %cst_21 = arith.constant 0.000000e+00 : f32
    %40 = vector.shape_cast %18 : vector<256x1xi1> to vector<256x1xi1>
    %41 = vector.broadcast %40 : vector<256x1xi1> to vector<256x128xi1>
    %42 = vector.broadcast %cst_21 : f32 to vector<256x128xf32>
    %43 = arith.select %41, %35, %42 : vector<256x128xi1>, vector<256x128xf32>
    %c0_22 = arith.constant 0 : index
    %c0_23 = arith.constant 0 : index
    %c0_24 = arith.constant 0 : index
    %44 = vector.load %arg8[%c0_22, %c0_23, %c0_24] : memref<1x1x128xf32, #tpu.memory_space<vmem>>, vector<1x1x128xf32>
    %cst_25 = arith.constant dense<0.000000e+00> : vector<128xf32>
    %45 = vector.multi_reduction <add>, %39, %cst_25 [0] : vector<256x128xf32> to vector<128xf32>
    %46 = vector.shape_cast %45 : vector<128xf32> to vector<1x128xf32>
    %47 = vector.shape_cast %46 : vector<1x128xf32> to vector<1x1x128xf32>
    %48 = arith.addf %44, %47 : vector<1x1x128xf32>
    %c0_26 = arith.constant 0 : index
    %c0_27 = arith.constant 0 : index
    %c0_28 = arith.constant 0 : index
    %49 = vector.load %arg8[%c0_26, %c0_27, %c0_28] : memref<1x1x128xf32, #tpu.memory_space<vmem>>, vector<1x1x128xf32>
    tpu.vector_store %arg8[%c0_26, %c0_27, %c0_28], %48 {strides = array<i32>} : memref<1x1x128xf32, #tpu.memory_space<vmem>>, vector<1x1x128xf32>,
    %c0_29 = arith.constant 0 : index
    %c0_30 = arith.constant 0 : index
    %c0_31 = arith.constant 0 : index
    %50 = vector.load %arg9[%c0_29, %c0_30, %c0_31] : memref<1x1x128xf32, #tpu.memory_space<vmem>>, vector<1x1x128xf32>
    %51 = arith.mulf %39, %39 : vector<256x128xf32>
    %cst_32 = arith.constant dense<0.000000e+00> : vector<128xf32>
    %52 = vector.multi_reduction <add>, %51, %cst_32 [0] : vector<256x128xf32> to vector<128xf32>
    %53 = vector.shape_cast %52 : vector<128xf32> to vector<1x128xf32>
    %54 = vector.shape_cast %53 : vector<1x128xf32> to vector<1x1x128xf32>
    %55 = arith.addf %50, %54 : vector<1x1x128xf32>
    %c0_33 = arith.constant 0 : index
    %c0_34 = arith.constant 0 : index
    %c0_35 = arith.constant 0 : index
    %56 = vector.load %arg9[%c0_33, %c0_34, %c0_35] : memref<1x1x128xf32, #tpu.memory_space<vmem>>, vector<1x1x128xf32>
    tpu.vector_store %arg9[%c0_33, %c0_34, %c0_35], %55 {strides = array<i32>} : memref<1x1x128xf32, #tpu.memory_space<vmem>>, vector<1x1x128xf32>,
    %c0_36 = arith.constant 0 : index
    %c0_37 = arith.constant 0 : index
    %c0_38 = arith.constant 0 : index
    %57 = vector.load %arg10[%c0_36, %c0_37, %c0_38] : memref<1x1x128xf32, #tpu.memory_space<vmem>>, vector<1x1x128xf32>
    %cst_39 = arith.constant dense<0.000000e+00> : vector<128xf32>
    %58 = vector.multi_reduction <add>, %43, %cst_39 [0] : vector<256x128xf32> to vector<128xf32>
    %59 = vector.shape_cast %58 : vector<128xf32> to vector<1x128xf32>
    %60 = vector.shape_cast %59 : vector<1x128xf32> to vector<1x1x128xf32>
    %61 = arith.addf %57, %60 : vector<1x1x128xf32>
    %c0_40 = arith.constant 0 : index
    %c0_41 = arith.constant 0 : index
    %c0_42 = arith.constant 0 : index
    %62 = vector.load %arg10[%c0_40, %c0_41, %c0_42] : memref<1x1x128xf32, #tpu.memory_space<vmem>>, vector<1x1x128xf32>
    tpu.vector_store %arg10[%c0_40, %c0_41, %c0_42], %61 {strides = array<i32>} : memref<1x1x128xf32, #tpu.memory_space<vmem>>, vector<1x1x128xf32>,
    %c0_43 = arith.constant 0 : index
    %c0_44 = arith.constant 0 : index
    %c0_45 = arith.constant 0 : index
    %63 = vector.load %arg11[%c0_43, %c0_44, %c0_45] : memref<1x1x128xf32, #tpu.memory_space<vmem>>, vector<1x1x128xf32>
    %64 = arith.mulf %43, %43 : vector<256x128xf32>
    %cst_46 = arith.constant dense<0.000000e+00> : vector<128xf32>
    %65 = vector.multi_reduction <add>, %64, %cst_46 [0] : vector<256x128xf32> to vector<128xf32>
    %66 = vector.shape_cast %65 : vector<128xf32> to vector<1x128xf32>
    %67 = vector.shape_cast %66 : vector<1x128xf32> to vector<1x1x128xf32>
    %68 = arith.addf %63, %67 : vector<1x1x128xf32>
    %c0_47 = arith.constant 0 : index
    %c0_48 = arith.constant 0 : index
    %c0_49 = arith.constant 0 : index
    %69 = vector.load %arg11[%c0_47, %c0_48, %c0_49] : memref<1x1x128xf32, #tpu.memory_space<vmem>>, vector<1x1x128xf32>
    tpu.vector_store %arg11[%c0_47, %c0_48, %c0_49], %68 {strides = array<i32>} : memref<1x1x128xf32, #tpu.memory_space<vmem>>, vector<1x1x128xf32>,
    %c0_50 = arith.constant 0 : index
    %c0_51 = arith.constant 0 : index
    %c0_52 = arith.constant 0 : index
    %70 = vector.load %arg12[%c0_50, %c0_51, %c0_52] : memref<1x1x128xf32, #tpu.memory_space<vmem>>, vector<1x1x128xf32>
    %71 = arith.mulf %39, %43 : vector<256x128xf32>
    %cst_53 = arith.constant dense<0.000000e+00> : vector<128xf32>
    %72 = vector.multi_reduction <add>, %71, %cst_53 [0] : vector<256x128xf32> to vector<128xf32>
    %73 = vector.shape_cast %72 : vector<128xf32> to vector<1x128xf32>
    %74 = vector.shape_cast %73 : vector<1x128xf32> to vector<1x1x128xf32>
    %75 = arith.addf %70, %74 : vector<1x1x128xf32>
    %c0_54 = arith.constant 0 : index
    %c0_55 = arith.constant 0 : index
    %c0_56 = arith.constant 0 : index
    %76 = vector.load %arg12[%c0_54, %c0_55, %c0_56] : memref<1x1x128xf32, #tpu.memory_space<vmem>>, vector<1x1x128xf32>
    tpu.vector_store %arg12[%c0_54, %c0_55, %c0_56], %75 {strides = array<i32>} : memref<1x1x128xf32, #tpu.memory_space<vmem>>, vector<1x1x128xf32>,
    return
  }
  func.func @transform_0(%arg0: i32, %arg1: i32) -> (i32, i32) {
    %c2_i32 = arith.constant 2 : i32
    %0 = arith.muli %arg0, %c2_i32 : i32
    %1 = arith.addi %0, %arg1 : i32
    %c2_i32_0 = arith.constant 2 : i32
    %2 = arith.minsi %1, %c2_i32_0 : i32
    %c0_i32 = arith.constant 0 : i32
    %c0_i32_1 = arith.constant 0 : i32
    return %2, %c0_i32 : i32, i32
  }
  func.func @transform_1(%arg0: i32, %arg1: i32) -> (i32, i32) {
    %c2_i32 = arith.constant 2 : i32
    %0 = arith.muli %arg0, %c2_i32 : i32
    %1 = arith.addi %0, %arg1 : i32
    %c2_i32_0 = arith.constant 2 : i32
    %2 = arith.minsi %1, %c2_i32_0 : i32
    %c0_i32 = arith.constant 0 : i32
    %c0_i32_1 = arith.constant 0 : i32
    return %2, %c0_i32 : i32, i32
  }
  func.func @transform_2(%arg0: i32, %arg1: i32) -> (i32, i32) {
    %c0_i32 = arith.constant 0 : i32
    %c0_i32_0 = arith.constant 0 : i32
    %c0_i32_1 = arith.constant 0 : i32
    return %c0_i32, %c0_i32_0 : i32, i32
  }
  func.func @transform_3(%arg0: i32, %arg1: i32) -> (i32, i32) {
    %c0_i32 = arith.constant 0 : i32
    %c0_i32_0 = arith.constant 0 : i32
    %c0_i32_1 = arith.constant 0 : i32
    return %c0_i32, %c0_i32_0 : i32, i32
  }
  func.func @transform_4(%arg0: i32, %arg1: i32) -> (i32, i32) {
    %c0_i32 = arith.constant 0 : i32
    %c0_i32_0 = arith.constant 0 : i32
    %c0_i32_1 = arith.constant 0 : i32
    return %c0_i32, %c0_i32_0 : i32, i32
  }
  func.func @transform_5(%arg0: i32, %arg1: i32) -> (i32, i32, i32) {
    %c0_i32 = arith.constant 0 : i32
    %c0_i32_0 = arith.constant 0 : i32
    %c0_i32_1 = arith.constant 0 : i32
    return %arg0, %c0_i32, %c0_i32_0 : i32, i32, i32
  }
  func.func @transform_6(%arg0: i32, %arg1: i32) -> (i32, i32, i32) {
    %c0_i32 = arith.constant 0 : i32
    %c0_i32_0 = arith.constant 0 : i32
    %c0_i32_1 = arith.constant 0 : i32
    return %arg0, %c0_i32, %c0_i32_0 : i32, i32, i32
  }
  func.func @transform_7(%arg0: i32, %arg1: i32) -> (i32, i32, i32) {
    %c0_i32 = arith.constant 0 : i32
    %c0_i32_0 = arith.constant 0 : i32
    %c0_i32_1 = arith.constant 0 : i32
    return %arg0, %c0_i32, %c0_i32_0 : i32, i32, i32
  }
  func.func @transform_8(%arg0: i32, %arg1: i32) -> (i32, i32, i32) {
    %c0_i32 = arith.constant 0 : i32
    %c0_i32_0 = arith.constant 0 : i32
    %c0_i32_1 = arith.constant 0 : i32
    return %arg0, %c0_i32, %c0_i32_0 : i32, i32, i32
  }
  func.func @transform_9(%arg0: i32, %arg1: i32) -> (i32, i32, i32) {
    %c0_i32 = arith.constant 0 : i32
    %c0_i32_0 = arith.constant 0 : i32
    %c0_i32_1 = arith.constant 0 : i32
    return %arg0, %c0_i32, %c0_i32_0 : i32, i32, i32
  }
  func.func @transform_10(%arg0: i32, %arg1: i32) -> (i32, i32, i32) {
    %c0_i32 = arith.constant 0 : i32
    %c0_i32_0 = arith.constant 0 : i32
    %c0_i32_1 = arith.constant 0 : i32
    return %arg0, %c0_i32, %c0_i32_0 : i32, i32, i32
  }
}

</mosaic_0001>

<llo_original>
// kernel: combined_forward.1
$region0: #{combined_forward.1}
  #allocation0 [shape = 'u32[]', space=smem, size = 0x4, offset = 0x4, fixed_abs, tag = 'smem constant byte address 0x4 - core index']
  #allocation1 [shape = 'u32[144,128]{1,0:T(1,128)}', space=vmem, size = 0x12000, scoped, tag = 'internal scratch']
  %s0 = inlined_call_operand.vmem [shape: f32[600,201], index: 0, kind: input, shape index: {}]
  %s1 = inlined_call_operand.vmem [shape: f32[600,201], index: 1, kind: input, shape index: {}]
  %s2 = inlined_call_operand.vmem [shape: bf16[201,201], index: 2, kind: input, shape index: {}]
  %s3 = inlined_call_operand.vmem [shape: f32[1,201], index: 3, kind: input, shape index: {}]
  %s4 = inlined_call_operand.vmem [shape: bf16[201,128], index: 4, kind: input, shape index: {}]
  %s5 = inlined_call_operand.vmem [shape: f32[2,1,201], index: 5, kind: output, shape index: {0}]
  %s6 = inlined_call_operand.vmem [shape: f32[2,1,128], index: 6, kind: output, shape index: {1}]
  %s7 = inlined_call_operand.vmem [shape: f32[2,1,128], index: 7, kind: output, shape index: {2}]
  %s8 = inlined_call_operand.vmem [shape: f32[2,1,128], index: 8, kind: output, shape index: {3}]
  %s9 = inlined_call_operand.vmem [shape: f32[2,1,128], index: 9, kind: output, shape index: {4}]
  %s10 = inlined_call_operand.vmem [shape: f32[2,1,128], index: 10, kind: output, shape index: {5}]
  %11 = xla_tuple %s5, %s6, %s7, %s8, %s9, %s10
  %s12 = sld [smem:[#allocation0]]
  $region97: #{combined_forward.1} parent=0
    _
  %s14 = ssub.s32 1, %s12
  %s15 = scalar_select 0, %s14, %s12
  loop: start=0, step=1, limit=6
  $region2: #{combined_forward.1} parent=0 // loop_pre_header
    _
  $region3: #{combined_forward.1} parent=0 // loop_header
    %s17 = sphi 0, %s21
    %p18 = scmp.ge.s32.totalorder %s17, 6
    %s24 = sphi 0, %s36
    %s25 = sphi 0, %s32
    %s26 = sphi 0, %s24
    %s27 = sphi 0, %s25
    %s28 = sphi 0, %s26
    %s29 = sphi 0, %s27
    %s47 = sphi 0, %s49
    %s50 = sphi 0, %s47
    %s51 = sphi 0, %s50
    %s67 = sphi 0, %s51
    %s81 = sphi 0, %s83
    %s84 = sphi 0, %s81
    %s85 = sphi 0, %s84
    %s101 = sphi 0, %s85
    %s105 = sphi 0, %s105
    %s107 = sphi 0, %s105
    %s108 = sphi 0, %s107
    %s122 = sphi 0, %s108
    %s126 = sphi 0, %s126
    %s128 = sphi 0, %s126
    %s129 = sphi 0, %s128
    %s143 = sphi 0, %s129
    %s147 = sphi 0, %s147
    %s149 = sphi 0, %s147
    %s150 = sphi 0, %s149
    %s164 = sphi 0, %s150
    %s170 = sphi 0, %s172
    %s173 = sphi 0, %s170
    %s174 = sphi 0, %s173
    %s190 = sphi 0, %s174
    %s196 = sphi 0, %s198
    %s199 = sphi 0, %s196
    %s200 = sphi 0, %s199
    %s216 = sphi 0, %s200
    %s222 = sphi 0, %s224
    %s225 = sphi 0, %s222
    %s226 = sphi 0, %s225
    %s242 = sphi 0, %s226
    %s248 = sphi 0, %s250
    %s251 = sphi 0, %s248
    %s252 = sphi 0, %s251
    %s268 = sphi 0, %s252
    %s274 = sphi 0, %s276
    %s277 = sphi 0, %s274
    %s278 = sphi 0, %s277
    %s294 = sphi 0, %s278
    %s300 = sphi 0, %s302
    %s303 = sphi 0, %s300
    %s304 = sphi 0, %s303
    %s320 = sphi 0, %s304
  $region4: #{combined_forward.1} parent=0 // loop_header_branch
    %20 = sbr.rel (%p18) target = $region8
  $region5: #{combined_forward.1} parent=0 // loop_body
    %s22 = ssub.s32 %s17, 1
    %s23 = ssub.s32 %s17, 2
    %s30 = sadd.s32 1, %s25
    %p31 = scmp.ge.s32.totalorder %s30, 2
    %s32 = scalar_select %p31, 0, %s30
    %s33 = sadd.s32 1, %s24
    %s34 = scalar_select %p31, %s33, %s24
    %p35 = scmp.ge.s32.totalorder %s34, 2
    %s36 = scalar_select %p35, 0, %s34
    %s37 = smul.u32 %s24, 2
    %s38 = sadd.s32 %s37, %s25
    %p39 = scmp.lt.s32.totalorder %s38, 2
    %s40 = scalar_select %p39, %s38, 2
    %s41 = smul.u32 %s36, 2
    %s42 = sadd.s32 %s41, %s32
    %p43 = scmp.lt.s32.totalorder %s42, 2
    %s44 = scalar_select %p43, %s42, 2
    %s45 = ssub.s32 %s40, %s44
    %p46 = scmp.eq.s32.totalorder %s45, 0
    %s48 = sadd.s32 %s47, 1
    %s49 = scalar_select %p46, %s47, %s48
    %p52 = pneg %p46
    %p53 = scmp.eq.s32.totalorder %s17, 3
    %p54 = por %p52, %p53
    %p55 = scmp.ne.s32.totalorder %s47, %s50
    %p56 = scmp.eq.s32.totalorder %s17, 0
    %p57 = por %p55, %p56
    %p58 = scmp.ne.s32.totalorder %s47, %s50
    %p59 = scmp.eq.s32.totalorder %s22, 3
    %p60 = por %p58, %p59
    %p61 = scmp.ne.s32.totalorder %s50, %s51
    %p62 = scmp.eq.s32.totalorder %s22, 0
    %p63 = por %p61, %p62
    %p64 = scmp.ne.s32.totalorder %s50, %s51
    %p65 = scmp.eq.s32.totalorder %s23, 3
    %p66 = por %p64, %p65
    %p68 = scmp.ne.s32.totalorder %s51, %s67
    %p69 = scmp.eq.s32.totalorder %s23, 0
    %p70 = por %p68, %p69
    %s71 = smul.u32 %s24, 2
    %s72 = sadd.s32 %s71, %s25
    %p73 = scmp.lt.s32.totalorder %s72, 2
    %s74 = scalar_select %p73, %s72, 2
    %s75 = smul.u32 %s36, 2
    %s76 = sadd.s32 %s75, %s32
    %p77 = scmp.lt.s32.totalorder %s76, 2
    %s78 = scalar_select %p77, %s76, 2
    %s79 = ssub.s32 %s74, %s78
    %p80 = scmp.eq.s32.totalorder %s79, 0
    %s82 = sadd.s32 %s81, 1
    %s83 = scalar_select %p80, %s81, %s82
    %p86 = pneg %p80
    %p87 = scmp.eq.s32.totalorder %s17, 3
    %p88 = por %p86, %p87
    %p89 = scmp.ne.s32.totalorder %s81, %s84
    %p90 = scmp.eq.s32.totalorder %s17, 0
    %p91 = por %p89, %p90
    %p92 = scmp.ne.s32.totalorder %s81, %s84
    %p93 = scmp.eq.s32.totalorder %s22, 3
    %p94 = por %p92, %p93
    %p95 = scmp.ne.s32.totalorder %s84, %s85
    %p96 = scmp.eq.s32.totalorder %s22, 0
    %p97 = por %p95, %p96
    %p98 = scmp.ne.s32.totalorder %s84, %s85
    %p99 = scmp.eq.s32.totalorder %s23, 3
    %p100 = por %p98, %p99
    %p102 = scmp.ne.s32.totalorder %s85, %s101
    %p103 = scmp.eq.s32.totalorder %s23, 0
    %p104 = por %p102, %p103
    %s106 = sadd.s32 %s105, 1
    %p109 = scmp.eq.s32.totalorder %s17, 3
    %p110 = scmp.ne.s32.totalorder %s105, %s107
    %p111 = scmp.eq.s32.totalorder %s17, 0
    %p112 = por %p110, %p111
    %p113 = scmp.ne.s32.totalorder %s105, %s107
    %p114 = scmp.eq.s32.totalorder %s22, 3
    %p115 = por %p113, %p114
    %p116 = scmp.ne.s32.totalorder %s107, %s108
    %p117 = scmp.eq.s32.totalorder %s22, 0
    %p118 = por %p116, %p117
    %p119 = scmp.ne.s32.totalorder %s107, %s108
    %p120 = scmp.eq.s32.totalorder %s23, 3
    %p121 = por %p119, %p120
    %p123 = scmp.ne.s32.totalorder %s108, %s122
    %p124 = scmp.eq.s32.totalorder %s23, 0
    %p125 = por %p123, %p124
    %s127 = sadd.s32 %s126, 1
    %p130 = scmp.eq.s32.totalorder %s17, 3
    %p131 = scmp.ne.s32.totalorder %s126, %s128
    %p132 = scmp.eq.s32.totalorder %s17, 0
    %p133 = por %p131, %p132
    %p134 = scmp.ne.s32.totalorder %s126, %s128
    %p135 = scmp.eq.s32.totalorder %s22, 3
    %p136 = por %p134, %p135
    %p137 = scmp.ne.s32.totalorder %s128, %s129
    %p138 = scmp.eq.s32.totalorder %s22, 0
    %p139 = por %p137, %p138
    %p140 = scmp.ne.s32.totalorder %s128, %s129
    %p141 = scmp.eq.s32.totalorder %s23, 3
    %p142 = por %p140, %p141
    %p144 = scmp.ne.s32.totalorder %s129, %s143
    %p145 = scmp.eq.s32.totalorder %s23, 0
    %p146 = por %p144, %p145
    %s148 = sadd.s32 %s147, 1
    %p151 = scmp.eq.s32.totalorder %s17, 3
    %p152 = scmp.ne.s32.totalorder %s147, %s149
    %p153 = scmp.eq.s32.totalorder %s17, 0
    %p154 = por %p152, %p153
    %p155 = scmp.ne.s32.totalorder %s147, %s149
    %p156 = scmp.eq.s32.totalorder %s22, 3
    %p157 = por %p155, %p156
    %p158 = scmp.ne.s32.totalorder %s149, %s150
    %p159 = scmp.eq.s32.totalorder %s22, 0
    %p160 = por %p158, %p159
    %p161 = scmp.ne.s32.totalorder %s149, %s150
    %p162 = scmp.eq.s32.totalorder %s23, 3
    %p163 = por %p161, %p162
    %p165 = scmp.ne.s32.totalorder %s150, %s164
    %p166 = scmp.eq.s32.totalorder %s23, 0
    %p167 = por %p165, %p166
    %s168 = ssub.s32 %s24, %s36
    %p169 = scmp.eq.s32.totalorder %s168, 0
    %s171 = sadd.s32 %s170, 1
    %s172 = scalar_select %p169, %s170, %s171
    %p175 = pneg %p169
    %p176 = scmp.eq.s32.totalorder %s17, 3
    %p177 = por %p175, %p176
    %p178 = scmp.ne.s32.totalorder %s170, %s173
    %p179 = scmp.eq.s32.totalorder %s17, 0
    %p180 = por %p178, %p179
    %p181 = scmp.ne.s32.totalorder %s170, %s173
    %p182 = scmp.eq.s32.totalorder %s22, 3
    %p183 = por %p181, %p182
    %p184 = scmp.ne.s32.totalorder %s173, %s174
    %p185 = scmp.eq.s32.totalorder %s22, 0
    %p186 = por %p184, %p185
    %p187 = scmp.ne.s32.totalorder %s173, %s174
    %p188 = scmp.eq.s32.totalorder %s23, 3
    %p189 = por %p187, %p188
    %p191 = scmp.ne.s32.totalorder %s174, %s190
    %p192 = scmp.eq.s32.totalorder %s23, 0
    %p193 = por %p191, %p192
    %s194 = ssub.s32 %s24, %s36
    %p195 = scmp.eq.s32.totalorder %s194, 0
    %s197 = sadd.s32 %s196, 1
    %s198 = scalar_select %p195, %s196, %s197
    %p201 = pneg %p195
    %p202 = scmp.eq.s32.totalorder %s17, 3
    %p203 = por %p201, %p202
    %p204 = scmp.ne.s32.totalorder %s196, %s199
    %p205 = scmp.eq.s32.totalorder %s17, 0
    %p206 = por %p204, %p205
    %p207 = scmp.ne.s32.totalorder %s196, %s199
    %p208 = scmp.eq.s32.totalorder %s22, 3
    %p209 = por %p207, %p208
    %p210 = scmp.ne.s32.totalorder %s199, %s200
    %p211 = scmp.eq.s32.totalorder %s22, 0
    %p212 = por %p210, %p211
    %p213 = scmp.ne.s32.totalorder %s199, %s200
    %p214 = scmp.eq.s32.totalorder %s23, 3
    %p215 = por %p213, %p214
    %p217 = scmp.ne.s32.totalorder %s200, %s216
    %p218 = scmp.eq.s32.totalorder %s23, 0
    %p219 = por %p217, %p218
    %s220 = ssub.s32 %s24, %s36
    %p221 = scmp.eq.s32.totalorder %s220, 0
    %s223 = sadd.s32 %s222, 1
    %s224 = scalar_select %p221, %s222, %s223
    %p227 = pneg %p221
    %p228 = scmp.eq.s32.totalorder %s17, 3
    %p229 = por %p227, %p228
    %p230 = scmp.ne.s32.totalorder %s222, %s225
    %p231 = scmp.eq.s32.totalorder %s17, 0
    %p232 = por %p230, %p231
    %p233 = scmp.ne.s32.totalorder %s222, %s225
    %p234 = scmp.eq.s32.totalorder %s22, 3
    %p235 = por %p233, %p234
    %p236 = scmp.ne.s32.totalorder %s225, %s226
    %p237 = scmp.eq.s32.totalorder %s22, 0
    %p238 = por %p236, %p237
    %p239 = scmp.ne.s32.totalorder %s225, %s226
    %p240 = scmp.eq.s32.totalorder %s23, 3
    %p241 = por %p239, %p240
    %p243 = scmp.ne.s32.totalorder %s226, %s242
    %p244 = scmp.eq.s32.totalorder %s23, 0
    %p245 = por %p243, %p244
    %s246 = ssub.s32 %s24, %s36
    %p247 = scmp.eq.s32.totalorder %s246, 0
    %s249 = sadd.s32 %s248, 1
    %s250 = scalar_select %p247, %s248, %s249
    %p253 = pneg %p247
    %p254 = scmp.eq.s32.totalorder %s17, 3
    %p255 = por %p253, %p254
    %p256 = scmp.ne.s32.totalorder %s248, %s251
    %p257 = scmp.eq.s32.totalorder %s17, 0
    %p258 = por %p256, %p257
    %p259 = scmp.ne.s32.totalorder %s248, %s251
    %p260 = scmp.eq.s32.totalorder %s22, 3
    %p261 = por %p259, %p260
    %p262 = scmp.ne.s32.totalorder %s251, %s252
    %p263 = scmp.eq.s32.totalorder %s22, 0
    %p264 = por %p262, %p263
    %p265 = scmp.ne.s32.totalorder %s251, %s252
    %p266 = scmp.eq.s32.totalorder %s23, 3
    %p267 = por %p265, %p266
    %p269 = scmp.ne.s32.totalorder %s252, %s268
    %p270 = scmp.eq.s32.totalorder %s23, 0
    %p271 = por %p269, %p270
    %s272 = ssub.s32 %s24, %s36
    %p273 = scmp.eq.s32.totalorder %s272, 0
    %s275 = sadd.s32 %s274, 1
    %s276 = scalar_select %p273, %s274, %s275
    %p279 = pneg %p273
    %p280 = scmp.eq.s32.totalorder %s17, 3
    %p281 = por %p279, %p280
    %p282 = scmp.ne.s32.totalorder %s274, %s277
    %p283 = scmp.eq.s32.totalorder %s17, 0
    %p284 = por %p282, %p283
    %p285 = scmp.ne.s32.totalorder %s274, %s277
    %p286 = scmp.eq.s32.totalorder %s22, 3
    %p287 = por %p285, %p286
    %p288 = scmp.ne.s32.totalorder %s277, %s278
    %p289 = scmp.eq.s32.totalorder %s22, 0
    %p290 = por %p288, %p289
    %p291 = scmp.ne.s32.totalorder %s277, %s278
    %p292 = scmp.eq.s32.totalorder %s23, 3
    %p293 = por %p291, %p292
    %p295 = scmp.ne.s32.totalorder %s278, %s294
    %p296 = scmp.eq.s32.totalorder %s23, 0
    %p297 = por %p295, %p296
    %s298 = ssub.s32 %s24, %s36
    %p299 = scmp.eq.s32.totalorder %s298, 0
    %s301 = sadd.s32 %s300, 1
    %s302 = scalar_select %p299, %s300, %s301
    %p305 = pneg %p299
    %p306 = scmp.eq.s32.totalorder %s17, 3
    %p307 = por %p305, %p306
    %p308 = scmp.ne.s32.totalorder %s300, %s303
    %p309 = scmp.eq.s32.totalorder %s17, 0
    %p310 = por %p308, %p309
    %p311 = scmp.ne.s32.totalorder %s300, %s303
    %p312 = scmp.eq.s32.totalorder %s22, 3
    %p313 = por %p311, %p312
    %p314 = scmp.ne.s32.totalorder %s303, %s304
    %p315 = scmp.eq.s32.totalorder %s22, 0
    %p316 = por %p314, %p315
    %p317 = scmp.ne.s32.totalorder %s303, %s304
    %p318 = scmp.eq.s32.totalorder %s23, 3
    %p319 = por %p317, %p318
    %p321 = scmp.ne.s32.totalorder %s304, %s320
    %p322 = scmp.eq.s32.totalorder %s23, 0
    %p323 = por %p321, %p322
    %p324 = scmp.le.s32.totalorder 1, %s17
    %p325 = scmp.lt.s32.totalorder %s17, 5
    %p326 = pnand %p324, %p325
    %p327 = pneg %p326
    // Predicated region
    $region9: #{combined_forward.1} parent=5 // pred_check
      _
    $region10: #{combined_forward.1} parent=5 // pred_check_branch
      %329 = sbr.rel (%p326) target = $region12
    $region11: #{combined_forward.1} parent=5 // pred_region
      %s330 = ssub.s32 %s17, 1
      // Predicated region
      $region13: #{combined_forward.1} parent=11 // pred_check
        %p331 = pneg %p118
      $region14: #{combined_forward.1} parent=11 // pred_check_branch
        %333 = sbr.rel (%p331) target = $region16
      $region15: #{combined_forward.1} parent=11 // pred_region
        _
      $region16: #{combined_forward.1} parent=11 // pred_fallthru
        _
      // Predicated region
      $region17: #{combined_forward.1} parent=11 // pred_check
        %p334 = pneg %p139
      $region18: #{combined_forward.1} parent=11 // pred_check_branch
        %336 = sbr.rel (%p334) target = $region20
      $region19: #{combined_forward.1} parent=11 // pred_region
        _
      $region20: #{combined_forward.1} parent=11 // pred_fallthru
        _
      // Predicated region
      $region21: #{combined_forward.1} parent=11 // pred_check
        %p337 = pneg %p160
      $region22: #{combined_forward.1} parent=11 // pred_check_branch
        %339 = sbr.rel (%p337) target = $region24
      $region23: #{combined_forward.1} parent=11 // pred_region
        _
      $region24: #{combined_forward.1} parent=11 // pred_fallthru
        _
    $region12: #{combined_forward.1} parent=5 // pred_fallthru
      _
    %p340 = scmp.lt.s32.totalorder %s17, 4
    // Predicated region
    $region25: #{combined_forward.1} parent=5 // pred_check
      %p341 = pneg %p340
    $region26: #{combined_forward.1} parent=5 // pred_check_branch
      %343 = sbr.rel (%p341) target = $region28
    $region27: #{combined_forward.1} parent=5 // pred_region
      // Predicated region
      $region29: #{combined_forward.1} parent=27 // pred_check
        %p344 = pneg %p57
      $region30: #{combined_forward.1} parent=27 // pred_check_branch
        %346 = sbr.rel (%p344) target = $region32
      $region31: #{combined_forward.1} parent=27 // pred_region
        %s347 = smul.u32 %s24, 2
        %s348 = sadd.s32 %s347, %s25
        %p349 = scmp.lt.s32.totalorder %s348, 2
        %s350 = scalar_select %p349, %s348, 2
        %s351 = smul.u32 32, %s350
        %s352 = ssub.s32 75, %s351
        %p353 = scmp.lt.s32.totalorder %s352, 32
        %s354 = scalar_select %p353, %s352, 32
        %s355 = smul.u32 128, %s354
        %s356 = smul.u32 %s355, 2
        %p357 = scmp.lt.s32.totalorder %s351, 74
        %s358 = scalar_select %p357, %s351, 74
        %s359 = smul.addr %s358, 2
        %s360 = smul.addr %s359, 8
        %s361 = scalar_lea.vmem %s0, %s360
        %s362 = smul.u32 %s24, 2
        %s363 = sadd.s32 %s362, %s25
        %p364 = scmp.lt.s32.totalorder %s363, 2
        %s365 = scalar_select %p364, %s363, 2
        %s366 = smul.u32 32, %s365
        %s367 = ssub.s32 75, %s366
        %p368 = scmp.lt.s32.totalorder %s367, 32
        %s369 = scalar_select %p368, %s367, 32
        %s370 = smul.u32 128, %s369
        %s371 = smul.u32 %s370, 2
      $region32: #{combined_forward.1} parent=27 // pred_fallthru
        _
      // Predicated region
      $region33: #{combined_forward.1} parent=27 // pred_check
        %p372 = pneg %p91
      $region34: #{combined_forward.1} parent=27 // pred_check_branch
        %374 = sbr.rel (%p372) target = $region36
      $region35: #{combined_forward.1} parent=27 // pred_region
        %s375 = smul.u32 %s24, 2
        %s376 = sadd.s32 %s375, %s25
        %p377 = scmp.lt.s32.totalorder %s376, 2
        %s378 = scalar_select %p377, %s376, 2
        %s379 = smul.u32 32, %s378
        %s380 = ssub.s32 75, %s379
        %p381 = scmp.lt.s32.totalorder %s380, 32
        %s382 = scalar_select %p381, %s380, 32
        %s383 = smul.u32 128, %s382
        %s384 = smul.u32 %s383, 2
        %p385 = scmp.lt.s32.totalorder %s379, 74
        %s386 = scalar_select %p385, %s379, 74
        %s387 = smul.addr %s386, 2
        %s388 = smul.addr %s387, 8
        %s389 = scalar_lea.vmem %s1, %s388
        %s390 = smul.u32 %s24, 2
        %s391 = sadd.s32 %s390, %s25
        %p392 = scmp.lt.s32.totalorder %s391, 2
        %s393 = scalar_select %p392, %s391, 2
        %s394 = smul.u32 32, %s393
        %s395 = ssub.s32 75, %s394
        %p396 = scmp.lt.s32.totalorder %s395, 32
        %s397 = scalar_select %p396, %s395, 32
        %s398 = smul.u32 128, %s397
        %s399 = smul.u32 %s398, 2
      $region36: #{combined_forward.1} parent=27 // pred_fallthru
        _
    $region28: #{combined_forward.1} parent=5 // pred_fallthru
      _
    %p400 = scmp.le.s32.totalorder 1, %s17
    %p401 = scmp.lt.s32.totalorder %s17, 5
    %p402 = pnand %p400, %p401
    %p403 = pneg %p402
    // Predicated region
    $region37: #{combined_forward.1} parent=5 // pred_check
      _
    $region38: #{combined_forward.1} parent=5 // pred_check_branch
      %405 = sbr.rel (%p402) target = $region40
    $region39: #{combined_forward.1} parent=5 // pred_region
      %s406 = ssub.s32 %s17, 1
      %s407 = smul.u32 %s26, 2
      %s408 = sadd.s32 %s407, %s27
      %p409 = scmp.lt.s32.totalorder %s408, 2
      %s410 = scalar_select %p409, %s408, 2
      %s411 = smul.u32 32, %s410
      %s412 = ssub.s32 75, %s411
      %p413 = scmp.lt.s32.totalorder %s412, 32
      %s414 = scalar_select %p413, %s412, 32
      %s415 = smul.u32 128, %s414
      %s416 = smul.u32 %s415, 2
      %p417 = scmp.lt.s32.totalorder %s411, 74
      %s418 = scalar_select %p417, %s411, 74
      %s419 = smul.addr %s418, 2
      %s420 = smul.addr %s419, 8
      %s421 = scalar_lea.vmem %s0, %s420
      %p422 = pneg %p63
      %p423 = pneg %p60
      %s424 = smul.u32 %s26, 2
      %s425 = sadd.s32 %s424, %s27
      %p426 = scmp.lt.s32.totalorder %s425, 2
      %s427 = scalar_select %p426, %s425, 2
      %s428 = smul.u32 32, %s427
      %s429 = ssub.s32 75, %s428
      %p430 = scmp.lt.s32.totalorder %s429, 32
      %s431 = scalar_select %p430, %s429, 32
      %s432 = smul.u32 128, %s431
      %s433 = smul.u32 %s432, 2
      %p434 = scmp.lt.s32.totalorder %s428, 74
      %s435 = scalar_select %p434, %s428, 74
      %s436 = smul.addr %s435, 2
      %s437 = smul.addr %s436, 8
      %s438 = scalar_lea.vmem %s1, %s437
      %p439 = pneg %p97
      %p440 = pneg %p94
      %p441 = pneg %p118
      %p442 = pneg %p115
      %p443 = pneg %p139
      %p444 = pneg %p136
      %p445 = pneg %p160
      %p446 = pneg %p157
      %p447 = pneg %p186
      %p448 = pneg %p183
      %p449 = scmp.lt.s32.totalorder %s26, 1
      %s450 = scalar_select %p449, %s26, 1
      %s451 = smul.addr %s450, 2
      %s452 = scalar_lea.vmem %s5, %s451
      %p453 = pneg %p212
      %p454 = pneg %p209
      %p455 = scmp.lt.s32.totalorder %s26, 1
      %s456 = scalar_select %p455, %s26, 1
      %s457 = scalar_lea.vmem %s6, %s456
      %p458 = pneg %p238
      %p459 = pneg %p235
      %p460 = scmp.lt.s32.totalorder %s26, 1
      %s461 = scalar_select %p460, %s26, 1
      %s462 = scalar_lea.vmem %s7, %s461
      %p463 = pneg %p264
      %p464 = pneg %p261
      %p465 = scmp.lt.s32.totalorder %s26, 1
      %s466 = scalar_select %p465, %s26, 1
      %s467 = scalar_lea.vmem %s8, %s466
      %p468 = pneg %p290
      %p469 = pneg %p287
      %p470 = scmp.lt.s32.totalorder %s26, 1
      %s471 = scalar_select %p470, %s26, 1
      %s472 = scalar_lea.vmem %s9, %s471
      %p473 = pneg %p316
      %p474 = pneg %p313
      %p475 = scmp.lt.s32.totalorder %s26, 1
      %s476 = scalar_select %p475, %s26, 1
      %s477 = scalar_lea.vmem %s10, %s476
      %s478 = smul.u32 %s26, 2
      %s479 = sadd.s32 %s478, %s27
      %p480 = scmp.lt.s32.totalorder %s479, 2
      %s481 = scalar_select %p480, %s479, 2
      %s482 = smul.u32 32, %s481
      %s483 = ssub.s32 75, %s482
      %p484 = scmp.lt.s32.totalorder %s483, 32
      %s485 = scalar_select %p484, %s483, 32
      %s486 = smul.u32 128, %s485
      %s487 = smul.u32 %s486, 2
      %p488 = scmp.lt.s32.totalorder %s482, 74
      %s489 = scalar_select %p488, %s482, 74
      %s490 = smul.addr %s489, 2
      %s491 = smul.addr %s490, 8
      %s492 = scalar_lea.vmem %s0, %s491
      %s493 = smul.u32 %s26, 2
      %s494 = sadd.s32 %s493, %s27
      %p495 = scmp.lt.s32.totalorder %s494, 2
      %s496 = scalar_select %p495, %s494, 2
      %s497 = smul.u32 32, %s496
      %s498 = ssub.s32 75, %s497
      %p499 = scmp.lt.s32.totalorder %s498, 32
      %s500 = scalar_select %p499, %s498, 32
      %s501 = smul.u32 128, %s500
      %s502 = smul.u32 %s501, 2
      %s503 = smul.u32 %s26, 2
      %s504 = sadd.s32 %s503, %s27
      %p505 = scmp.lt.s32.totalorder %s504, 2
      %s506 = scalar_select %p505, %s504, 2
      %s507 = smul.u32 32, %s506
      %s508 = ssub.s32 75, %s507
      %p509 = scmp.lt.s32.totalorder %s508, 32
      %s510 = scalar_select %p509, %s508, 32
      %s511 = smul.u32 128, %s510
      %s512 = smul.u32 %s511, 2
      %p513 = scmp.lt.s32.totalorder %s507, 74
      %s514 = scalar_select %p513, %s507, 74
      %s515 = smul.addr %s514, 2
      %s516 = smul.addr %s515, 8
      %s517 = scalar_lea.vmem %s1, %s516
      %s518 = smul.u32 %s26, 2
      %s519 = sadd.s32 %s518, %s27
      %p520 = scmp.lt.s32.totalorder %s519, 2
      %s521 = scalar_select %p520, %s519, 2
      %s522 = smul.u32 32, %s521
      %s523 = ssub.s32 75, %s522
      %p524 = scmp.lt.s32.totalorder %s523, 32
      %s525 = scalar_select %p524, %s523, 32
      %s526 = smul.u32 128, %s525
      %s527 = smul.u32 %s526, 2
      %p528 = scmp.lt.s32.totalorder %s26, 1
      %s529 = scalar_select %p528, %s26, 1
      %s530 = smul.addr %s529, 2
      %s531 = scalar_lea.vmem %s5, %s530
      %p532 = scmp.lt.s32.totalorder %s26, 1
      %s533 = scalar_select %p532, %s26, 1
      %s534 = scalar_lea.vmem %s6, %s533
      %p535 = scmp.lt.s32.totalorder %s26, 1
      %s536 = scalar_select %p535, %s26, 1
      %s537 = scalar_lea.vmem %s7, %s536
      %p538 = scmp.lt.s32.totalorder %s26, 1
      %s539 = scalar_select %p538, %s26, 1
      %s540 = scalar_lea.vmem %s8, %s539
      %p541 = scmp.lt.s32.totalorder %s26, 1
      %s542 = scalar_select %p541, %s26, 1
      %s543 = scalar_lea.vmem %s9, %s542
      %p544 = scmp.lt.s32.totalorder %s26, 1
      %s545 = scalar_select %p544, %s26, 1
      %s546 = scalar_lea.vmem %s10, %s545
      %p548 = scmp.eq.s32.totalorder %s27, 0
      // Predicated region
      $region41: #{combined_forward.1} parent=39 // pred_check
        %p549 = pneg %p548
      $region42: #{combined_forward.1} parent=39 // pred_check_branch
        %551 = sbr.rel (%p549) target = $region44
      $region43: #{combined_forward.1} parent=39 // pred_region
        %v552 = vlaneseq
        %vm553 = vcmp.ge.s32.totalorder %v552, 0
        %vm554 = vcmp.lt.s32.totalorder %v552, 201
        %vm555 = vmand %vm553, %vm554
        %556 = vst.msk [vmem:[%s531] sm:$0x3] %vm555, 0.0
        %557 = vst [vmem:[%s534] sm:$0x1] 0.0
        %558 = vst [vmem:[%s537] sm:$0x1] 0.0
        %559 = vst [vmem:[%s540] sm:$0x1] 0.0
        %560 = vst [vmem:[%s543] sm:$0x1] 0.0
        %561 = vst [vmem:[%s546] sm:$0x1] 0.0
      $region44: #{combined_forward.1} parent=39 // pred_fallthru
        _
      %v562 = vld [vmem:[%s492] sm:$0xff]
      %v563 = vld [vmem:[%s492 + $0x8] sm:$0xff]
      %v564 = vld [vmem:[%s492 + $0x10] sm:$0xff]
      %v565 = vld [vmem:[%s492 + $0x18] sm:$0xff]
      %v566 = vld [vmem:[%s492 + $0x20] sm:$0xff]
      %v567 = vld [vmem:[%s492 + $0x28] sm:$0xff]
      %v568 = vld [vmem:[%s492 + $0x30] sm:$0xff]
      %v569 = vld [vmem:[%s492 + $0x38] sm:$0xff]
      %v570 = vld [vmem:[%s492 + $0x40] sm:$0xff]
      %v571 = vld [vmem:[%s492 + $0x48] sm:$0xff]
      %v572 = vld [vmem:[%s492 + $0x50] sm:$0xff]
      %v573 = vld [vmem:[%s492 + $0x58] sm:$0xff]
      %v574 = vld [vmem:[%s492 + $0x60] sm:$0xff]
      %v575 = vld [vmem:[%s492 + $0x68] sm:$0xff]
      %v576 = vld [vmem:[%s492 + $0x70] sm:$0xff]
      %v577 = vld [vmem:[%s492 + $0x78] sm:$0xff]
      %v578 = vld [vmem:[%s492 + $0x80] sm:$0xff]
      %v579 = vld [vmem:[%s492 + $0x88] sm:$0xff]
      %v580 = vld [vmem:[%s492 + $0x90] sm:$0xff]
      %v581 = vld [vmem:[%s492 + $0x98] sm:$0xff]
      %v582 = vld [vmem:[%s492 + $0xa0] sm:$0xff]
      %v583 = vld [vmem:[%s492 + $0xa8] sm:$0xff]
      %v584 = vld [vmem:[%s492 + $0xb0] sm:$0xff]
      %v585 = vld [vmem:[%s492 + $0xb8] sm:$0xff]
      %v586 = vld [vmem:[%s492 + $0xc0] sm:$0xff]
      %v587 = vld [vmem:[%s492 + $0xc8] sm:$0xff]
      %v588 = vld [vmem:[%s492 + $0xd0] sm:$0xff]
      %v589 = vld [vmem:[%s492 + $0xd8] sm:$0xff]
      %v590 = vld [vmem:[%s492 + $0xe0] sm:$0xff]
      %v591 = vld [vmem:[%s492 + $0xe8] sm:$0xff]
      %v592 = vld [vmem:[%s492 + $0xf0] sm:$0xff]
      %v593 = vld [vmem:[%s492 + $0xf8] sm:$0xff]
      %v594 = vld [vmem:[%s492 + $0x100] sm:$0xff]
      %v595 = vld [vmem:[%s492 + $0x108] sm:$0xff]
      %v596 = vld [vmem:[%s492 + $0x110] sm:$0xff]
      %v597 = vld [vmem:[%s492 + $0x118] sm:$0xff]
      %v598 = vld [vmem:[%s492 + $0x120] sm:$0xff]
      %v599 = vld [vmem:[%s492 + $0x128] sm:$0xff]
      %v600 = vld [vmem:[%s492 + $0x130] sm:$0xff]
      %v601 = vld [vmem:[%s492 + $0x138] sm:$0xff]
      %v602 = vld [vmem:[%s492 + $0x140] sm:$0xff]
      %v603 = vld [vmem:[%s492 + $0x148] sm:$0xff]
      %v604 = vld [vmem:[%s492 + $0x150] sm:$0xff]
      %v605 = vld [vmem:[%s492 + $0x158] sm:$0xff]
      %v606 = vld [vmem:[%s492 + $0x160] sm:$0xff]
      %v607 = vld [vmem:[%s492 + $0x168] sm:$0xff]
      %v608 = vld [vmem:[%s492 + $0x170] sm:$0xff]
      %v609 = vld [vmem:[%s492 + $0x178] sm:$0xff]
      %v610 = vld [vmem:[%s492 + $0x180] sm:$0xff]
      %v611 = vld [vmem:[%s492 + $0x188] sm:$0xff]
      %v612 = vld [vmem:[%s492 + $0x190] sm:$0xff]
      %v613 = vld [vmem:[%s492 + $0x198] sm:$0xff]
      %v614 = vld [vmem:[%s492 + $0x1a0] sm:$0xff]
      %v615 = vld [vmem:[%s492 + $0x1a8] sm:$0xff]
      %v616 = vld [vmem:[%s492 + $0x1b0] sm:$0xff]
      %v617 = vld [vmem:[%s492 + $0x1b8] sm:$0xff]
      %v618 = vld [vmem:[%s492 + $0x1c0] sm:$0xff]
      %v619 = vld [vmem:[%s492 + $0x1c8] sm:$0xff]
      %v620 = vld [vmem:[%s492 + $0x1d0] sm:$0xff]
      %v621 = vld [vmem:[%s492 + $0x1d8] sm:$0xff]
      %v622 = vld [vmem:[%s492 + $0x1e0] sm:$0xff]
      %v623 = vld [vmem:[%s492 + $0x1e8] sm:$0xff]
      %v624 = vld [vmem:[%s492 + $0x1f0] sm:$0xff]
      %v625 = vld [vmem:[%s492 + $0x1f8] sm:$0xff]
      %v626 = vld [vmem:[%s517] sm:$0xff]
      %v627 = vld [vmem:[%s517 + $0x8] sm:$0xff]
      %v628 = vld [vmem:[%s517 + $0x10] sm:$0xff]
      %v629 = vld [vmem:[%s517 + $0x18] sm:$0xff]
      %v630 = vld [vmem:[%s517 + $0x20] sm:$0xff]
      %v631 = vld [vmem:[%s517 + $0x28] sm:$0xff]
      %v632 = vld [vmem:[%s517 + $0x30] sm:$0xff]
      %v633 = vld [vmem:[%s517 + $0x38] sm:$0xff]
      %v634 = vld [vmem:[%s517 + $0x40] sm:$0xff]
      %v635 = vld [vmem:[%s517 + $0x48] sm:$0xff]
      %v636 = vld [vmem:[%s517 + $0x50] sm:$0xff]
      %v637 = vld [vmem:[%s517 + $0x58] sm:$0xff]
      %v638 = vld [vmem:[%s517 + $0x60] sm:$0xff]
      %v639 = vld [vmem:[%s517 + $0x68] sm:$0xff]
      %v640 = vld [vmem:[%s517 + $0x70] sm:$0xff]
      %v641 = vld [vmem:[%s517 + $0x78] sm:$0xff]
      %v642 = vld [vmem:[%s517 + $0x80] sm:$0xff]
      %v643 = vld [vmem:[%s517 + $0x88] sm:$0xff]
      %v644 = vld [vmem:[%s517 + $0x90] sm:$0xff]
      %v645 = vld [vmem:[%s517 + $0x98] sm:$0xff]
      %v646 = vld [vmem:[%s517 + $0xa0] sm:$0xff]
      %v647 = vld [vmem:[%s517 + $0xa8] sm:$0xff]
      %v648 = vld [vmem:[%s517 + $0xb0] sm:$0xff]
      %v649 = vld [vmem:[%s517 + $0xb8] sm:$0xff]
      %v650 = vld [vmem:[%s517 + $0xc0] sm:$0xff]
      %v651 = vld [vmem:[%s517 + $0xc8] sm:$0xff]
      %v652 = vld [vmem:[%s517 + $0xd0] sm:$0xff]
      %v653 = vld [vmem:[%s517 + $0xd8] sm:$0xff]
      %v654 = vld [vmem:[%s517 + $0xe0] sm:$0xff]
      %v655 = vld [vmem:[%s517 + $0xe8] sm:$0xff]
      %v656 = vld [vmem:[%s517 + $0xf0] sm:$0xff]
      %v657 = vld [vmem:[%s517 + $0xf8] sm:$0xff]
      %v658 = vld [vmem:[%s517 + $0x100] sm:$0xff]
      %v659 = vld [vmem:[%s517 + $0x108] sm:$0xff]
      %v660 = vld [vmem:[%s517 + $0x110] sm:$0xff]
      %v661 = vld [vmem:[%s517 + $0x118] sm:$0xff]
      %v662 = vld [vmem:[%s517 + $0x120] sm:$0xff]
      %v663 = vld [vmem:[%s517 + $0x128] sm:$0xff]
      %v664 = vld [vmem:[%s517 + $0x130] sm:$0xff]
      %v665 = vld [vmem:[%s517 + $0x138] sm:$0xff]
      %v666 = vld [vmem:[%s517 + $0x140] sm:$0xff]
      %v667 = vld [vmem:[%s517 + $0x148] sm:$0xff]
      %v668 = vld [vmem:[%s517 + $0x150] sm:$0xff]
      %v669 = vld [vmem:[%s517 + $0x158] sm:$0xff]
      %v670 = vld [vmem:[%s517 + $0x160] sm:$0xff]
      %v671 = vld [vmem:[%s517 + $0x168] sm:$0xff]
      %v672 = vld [vmem:[%s517 + $0x170] sm:$0xff]
      %v673 = vld [vmem:[%s517 + $0x178] sm:$0xff]
      %v674 = vld [vmem:[%s517 + $0x180] sm:$0xff]
      %v675 = vld [vmem:[%s517 + $0x188] sm:$0xff]
      %v676 = vld [vmem:[%s517 + $0x190] sm:$0xff]
      %v677 = vld [vmem:[%s517 + $0x198] sm:$0xff]
      %v678 = vld [vmem:[%s517 + $0x1a0] sm:$0xff]
      %v679 = vld [vmem:[%s517 + $0x1a8] sm:$0xff]
      %v680 = vld [vmem:[%s517 + $0x1b0] sm:$0xff]
      %v681 = vld [vmem:[%s517 + $0x1b8] sm:$0xff]
      %v682 = vld [vmem:[%s517 + $0x1c0] sm:$0xff]
      %v683 = vld [vmem:[%s517 + $0x1c8] sm:$0xff]
      %v684 = vld [vmem:[%s517 + $0x1d0] sm:$0xff]
      %v685 = vld [vmem:[%s517 + $0x1d8] sm:$0xff]
      %v686 = vld [vmem:[%s517 + $0x1e0] sm:$0xff]
      %v687 = vld [vmem:[%s517 + $0x1e8] sm:$0xff]
      %v688 = vld [vmem:[%s517 + $0x1f0] sm:$0xff]
      %v689 = vld [vmem:[%s517 + $0x1f8] sm:$0xff]
      %v690 = vpack.c.bf16 %v564, %v562
      %v691 = vpack.c.bf16 %v565, %v563
      %v692 = vpack.c.bf16 %v568, %v566
      %v693 = vpack.c.bf16 %v569, %v567
      %v694 = vpack.c.bf16 %v572, %v570
      %v695 = vpack.c.bf16 %v573, %v571
      %v696 = vpack.c.bf16 %v576, %v574
      %v697 = vpack.c.bf16 %v577, %v575
      %v698 = vpack.c.bf16 %v580, %v578
      %v699 = vpack.c.bf16 %v581, %v579
      %v700 = vpack.c.bf16 %v584, %v582
      %v701 = vpack.c.bf16 %v585, %v583
      %v702 = vpack.c.bf16 %v588, %v586
      %v703 = vpack.c.bf16 %v589, %v587
      %v704 = vpack.c.bf16 %v592, %v590
      %v705 = vpack.c.bf16 %v593, %v591
      %v706 = vpack.c.bf16 %v596, %v594
      %v707 = vpack.c.bf16 %v597, %v595
      %v708 = vpack.c.bf16 %v600, %v598
      %v709 = vpack.c.bf16 %v601, %v599
      %v710 = vpack.c.bf16 %v604, %v602
      %v711 = vpack.c.bf16 %v605, %v603
      %v712 = vpack.c.bf16 %v608, %v606
      %v713 = vpack.c.bf16 %v609, %v607
      %v714 = vpack.c.bf16 %v612, %v610
      %v715 = vpack.c.bf16 %v613, %v611
      %v716 = vpack.c.bf16 %v616, %v614
      %v717 = vpack.c.bf16 %v617, %v615
      %v718 = vpack.c.bf16 %v620, %v618
      %v719 = vpack.c.bf16 %v621, %v619
      %v720 = vpack.c.bf16 %v624, %v622
      %v721 = vpack.c.bf16 %v625, %v623
      %v722 = vld [vmem:[%s2] sm:$0xff]
      %v723 = vld [vmem:[%s2 + $0x8] sm:$0xff]
      %v724 = vld [vmem:[%s2 + $0x10] sm:$0xff]
      %v725 = vld [vmem:[%s2 + $0x18] sm:$0xff]
      %v726 = vld [vmem:[%s2 + $0x20] sm:$0xff]
      %v727 = vld [vmem:[%s2 + $0x28] sm:$0xff]
      %v728 = vld [vmem:[%s2 + $0x30] sm:$0xff]
      %v729 = vld [vmem:[%s2 + $0x38] sm:$0xff]
      %v730 = vld [vmem:[%s2 + $0x40] sm:$0xff]
      %v731 = vld [vmem:[%s2 + $0x48] sm:$0xff]
      %v732 = vld [vmem:[%s2 + $0x50] sm:$0xff]
      %v733 = vld [vmem:[%s2 + $0x58] sm:$0xff]
      %v734 = vld [vmem:[%s2 + $0x60] sm:$0xff]
      %v735 = vld [vmem:[%s2 + $0x68] sm:$0xff]
      %v736 = vld [vmem:[%s2 + $0x70] sm:$0xff]
      %v737 = vld [vmem:[%s2 + $0x78] sm:$0xff]
      %v738 = vld [vmem:[%s2 + $0x80] sm:$0xff]
      %v739 = vld [vmem:[%s2 + $0x88] sm:$0xff]
      %v740 = vld [vmem:[%s2 + $0x90] sm:$0xff]
      %v741 = vld [vmem:[%s2 + $0x98] sm:$0xff]
      %v742 = vld [vmem:[%s2 + $0xa0] sm:$0xff]
      %v743 = vld [vmem:[%s2 + $0xa8] sm:$0xff]
      %v744 = vld [vmem:[%s2 + $0xb0] sm:$0xff]
      %v745 = vld [vmem:[%s2 + $0xb8] sm:$0xff]
      %v746 = vld [vmem:[%s2 + $0xc0] sm:$0xff]
      %v747 = vld [vmem:[%s2 + $0xc8] sm:$0x11]
      %v748 = vld [vmem:[%s3] sm:$0x3]
      %v750 = vlaneseq
      %v751 = vshrl.u32 %v750, 7
      %v752 = vsub.s32 0, %v751
      %v753 = vrot.slane %v748, %v752
      %v754 = vlaneseq
      %v755 = vshrl.u32 %v754, 7
      %v756 = vsub.s32 1, %v755
      %v757 = vrot.slane %v748, %v756
      %v786 = vunpack.c.l.b16 %v722
      %v787 = vunpack.c.h.b16 %v722
      %v788 = vunpack.c.l.b16 %v723
      %v789 = vunpack.c.h.b16 %v723
      %v790 = vunpack.c.l.b16 %v724
      %v791 = vunpack.c.h.b16 %v724
      %v792 = vunpack.c.l.b16 %v725
      %v793 = vunpack.c.h.b16 %v725
      %v794 = vunpack.c.l.b16 %v726
      %v795 = vunpack.c.h.b16 %v726
      %v796 = vunpack.c.l.b16 %v727
      %v797 = vunpack.c.h.b16 %v727
      %v798 = vunpack.c.l.b16 %v728
      %v799 = vunpack.c.h.b16 %v728
      %v800 = vunpack.c.l.b16 %v729
      %v801 = vunpack.c.h.b16 %v729
      %v802 = vunpack.c.l.b16 %v730
      %v803 = vunpack.c.h.b16 %v730
      %v804 = vunpack.c.l.b16 %v731
      %v805 = vunpack.c.h.b16 %v731
      %v806 = vunpack.c.l.b16 %v732
      %v807 = vunpack.c.h.b16 %v732
      %v808 = vunpack.c.l.b16 %v733
      %v809 = vunpack.c.h.b16 %v733
      %v810 = vunpack.c.l.b16 %v734
      %v811 = vunpack.c.h.b16 %v734
      %v812 = vunpack.c.l.b16 %v735
      %v813 = vunpack.c.h.b16 %v735
      %v814 = vunpack.c.l.b16 %v736
      %v815 = vunpack.c.h.b16 %v736
      %v816 = vunpack.c.l.b16 %v737
      %v817 = vunpack.c.h.b16 %v737
      %v818 = vunpack.c.l.b16 %v738
      %v819 = vunpack.c.h.b16 %v738
      %v820 = vunpack.c.l.b16 %v739
      %v821 = vunpack.c.h.b16 %v739
      %v822 = vunpack.c.l.b16 %v740
      %v823 = vunpack.c.h.b16 %v740
      %v824 = vunpack.c.l.b16 %v741
      %v825 = vunpack.c.h.b16 %v741
      %v826 = vunpack.c.l.b16 %v742
      %v827 = vunpack.c.h.b16 %v742
      %v828 = vunpack.c.l.b16 %v743
      %v829 = vunpack.c.h.b16 %v743
      %v830 = vunpack.c.l.b16 %v744
      %v831 = vunpack.c.h.b16 %v744
      %v832 = vunpack.c.l.b16 %v745
      %v833 = vunpack.c.h.b16 %v745
      %v834 = vunpack.c.l.b16 %v746
      %v835 = vunpack.c.h.b16 %v746
      %v836 = vunpack.c.l.b16 %v747
      %v837 = vunpack.c.h.b16 %v747
      %v838 = vpack.c.b16 %v788, %v786
      %v839 = vpack.c.b16 %v789, %v787
      %v840 = vpack.c.b16 %v792, %v790
      %v841 = vpack.c.b16 %v793, %v791
      %v842 = vpack.c.b16 %v796, %v794
      %v843 = vpack.c.b16 %v797, %v795
      %v844 = vpack.c.b16 %v800, %v798
      %v845 = vpack.c.b16 %v801, %v799
      %v846 = vpack.c.b16 %v804, %v802
      %v847 = vpack.c.b16 %v805, %v803
      %v848 = vpack.c.b16 %v808, %v806
      %v849 = vpack.c.b16 %v809, %v807
      %v850 = vpack.c.b16 %v812, %v810
      %v851 = vpack.c.b16 %v813, %v811
      %v852 = vpack.c.b16 %v816, %v814
      %v853 = vpack.c.b16 %v817, %v815
      %v854 = vpack.c.b16 %v820, %v818
      %v855 = vpack.c.b16 %v821, %v819
      %v856 = vpack.c.b16 %v824, %v822
      %v857 = vpack.c.b16 %v825, %v823
      %v858 = vpack.c.b16 %v828, %v826
      %v859 = vpack.c.b16 %v829, %v827
      %v860 = vpack.c.b16 %v832, %v830
      %v861 = vpack.c.b16 %v833, %v831
      %v862 = vpack.c.b16 %v836, %v834
      %v863 = vpack.c.b16 %v837, %v835
      %vm888 = vcmask 596992
      %v890 = vsel %vm888, %v691, 0
      %v893 = vsel %vm888, %v693, 0
      %v896 = vsel %vm888, %v695, 0
      %v899 = vsel %vm888, %v697, 0
      %v902 = vsel %vm888, %v699, 0
      %v905 = vsel %vm888, %v701, 0
      %v908 = vsel %vm888, %v703, 0
      %v911 = vsel %vm888, %v705, 0
      %v914 = vsel %vm888, %v707, 0
      %v917 = vsel %vm888, %v709, 0
      %v920 = vsel %vm888, %v711, 0
      %v923 = vsel %vm888, %v713, 0
      %v926 = vsel %vm888, %v715, 0
      %v929 = vsel %vm888, %v717, 0
      %v932 = vsel %vm888, %v719, 0
      %v935 = vsel %vm888, %v721, 0
      %vm937 = vcmask 1043456
      %vm938 = vcmask 1044480
      %v939 = vsel %vm937, 4294967295, 65535
      %v940 = vsel %vm938, %v939, 0
      %v942 = vand.u32 %v862, %v940
      %v945 = vand.u32 %v863, %v940
      %947 = vmatprep.subr.bf16.mxu0 %v839
      %948 = vmatpush1.bf16.msra.mxu0 %v838
      %949 = vmatprep.subr.bf16.mxu0 %v841
      %950 = vmatpush1.bf16.msra.mxu0 %v840
      %951 = vmatprep.subr.bf16.mxu0 %v843
      %952 = vmatpush1.bf16.msra.mxu0 %v842
      %953 = vmatprep.subr.bf16.mxu0 %v845
      %954 = vmatpush1.bf16.msra.mxu0 %v844
      %955 = vmatprep.subr.bf16.mxu0 %v847
      %956 = vmatpush1.bf16.msra.mxu0 %v846
      %957 = vmatprep.subr.bf16.mxu0 %v849
      %958 = vmatpush1.bf16.msra.mxu0 %v848
      %959 = vmatprep.subr.bf16.mxu0 %v851
      %960 = vmatpush1.bf16.msra.mxu0 %v850
      %961 = vmatprep.subr.bf16.mxu0 %v853
      %962 = vmatpush1.bf16.msra.mxu0 %v852
      %963 = vmatprep.subr.bf16.mxu0 %v855
      %964 = vmatpush1.bf16.msra.mxu0 %v854
      %965 = vmatprep.subr.bf16.mxu0 %v857
      %966 = vmatpush1.bf16.msra.mxu0 %v856
      %967 = vmatprep.subr.bf16.mxu0 %v859
      %968 = vmatpush1.bf16.msra.mxu0 %v858
      %969 = vmatprep.subr.bf16.mxu0 %v861
      %970 = vmatpush1.bf16.msra.mxu0 %v860
      %971 = vmatprep.subr.bf16.mxu0 %v945
      %972 = vmatpush1.bf16.msra.mxu0 %v942
      %973 = vmatprep.subr.bf16.mxu0 0
      %974 = vmatpush1.bf16.msra.mxu0 0
      %975 = vmatprep.subr.bf16.mxu0 0
      %976 = vmatpush1.bf16.msra.mxu0 0
      %977 = vmatprep.subr.bf16.mxu0 0
      %978 = vmatpush1.bf16.msra.mxu0 0
      %979 = vmatprep.mubr.bf16.mxu0 %v890
      %980 = vmatmul.mubr.bf16.gmra.mrb[0].mxu0 %v690
      %v981 = vpop.f32.mrb[0].mxu0
      %v982 = vadd.f32 %v753, %v981
      %v983 = vpop.f32.mrb[0].mxu0
      %v984 = vadd.f32 %v757, %v983
      %v985 = vpop.f32.mrb[0].mxu0
      %v986 = vadd.f32 %v753, %v985
      %v987 = vpop.f32.mrb[0].mxu0
      %v988 = vadd.f32 %v757, %v987
      %989 = vmatprep.mubr.bf16.mxu0 %v893
      %990 = vmatmul.mubr.bf16.gmra.mrb[0].mxu0 %v692
      %v991 = vpop.f32.mrb[0].mxu0
      %v992 = vadd.f32 %v753, %v991
      %v993 = vpop.f32.mrb[0].mxu0
      %v994 = vadd.f32 %v757, %v993
      %v995 = vpop.f32.mrb[0].mxu0
      %v996 = vadd.f32 %v753, %v995
      %v997 = vpop.f32.mrb[0].mxu0
      %v998 = vadd.f32 %v757, %v997
      %999 = vmatprep.mubr.bf16.mxu0 %v896
      %1000 = vmatmul.mubr.bf16.gmra.mrb[0].mxu0 %v694
      %v1001 = vpop.f32.mrb[0].mxu0
      %v1002 = vadd.f32 %v753, %v1001
      %v1003 = vpop.f32.mrb[0].mxu0
      %v1004 = vadd.f32 %v757, %v1003
      %v1005 = vpop.f32.mrb[0].mxu0
      %v1006 = vadd.f32 %v753, %v1005
      %v1007 = vpop.f32.mrb[0].mxu0
      %v1008 = vadd.f32 %v757, %v1007
      %1009 = vmatprep.mubr.bf16.mxu0 %v899
      %1010 = vmatmul.mubr.bf16.gmra.mrb[0].mxu0 %v696
      %v1011 = vpop.f32.mrb[0].mxu0
      %v1012 = vadd.f32 %v753, %v1011
      %v1013 = vpop.f32.mrb[0].mxu0
      %v1014 = vadd.f32 %v757, %v1013
      %v1015 = vpop.f32.mrb[0].mxu0
      %v1016 = vadd.f32 %v753, %v1015
      %v1017 = vpop.f32.mrb[0].mxu0
      %v1018 = vadd.f32 %v757, %v1017
      %1019 = vmatprep.mubr.bf16.mxu0 %v902
      %1020 = vmatmul.mubr.bf16.gmra.mrb[0].mxu0 %v698
      %v1021 = vpop.f32.mrb[0].mxu0
      %v1022 = vadd.f32 %v753, %v1021
      %v1023 = vpop.f32.mrb[0].mxu0
      %v1024 = vadd.f32 %v757, %v1023
      %v1025 = vpop.f32.mrb[0].mxu0
      %v1026 = vadd.f32 %v753, %v1025
      %v1027 = vpop.f32.mrb[0].mxu0
      %v1028 = vadd.f32 %v757, %v1027
      %1029 = vmatprep.mubr.bf16.mxu0 %v905
      %1030 = vmatmul.mubr.bf16.gmra.mrb[0].mxu0 %v700
      %v1031 = vpop.f32.mrb[0].mxu0
      %v1032 = vadd.f32 %v753, %v1031
      %v1033 = vpop.f32.mrb[0].mxu0
      %v1034 = vadd.f32 %v757, %v1033
      %v1035 = vpop.f32.mrb[0].mxu0
      %v1036 = vadd.f32 %v753, %v1035
      %v1037 = vpop.f32.mrb[0].mxu0
      %v1038 = vadd.f32 %v757, %v1037
      %1039 = vmatprep.mubr.bf16.mxu0 %v908
      %1040 = vmatmul.mubr.bf16.gmra.mrb[0].mxu0 %v702
      %v1041 = vpop.f32.mrb[0].mxu0
      %v1042 = vadd.f32 %v753, %v1041
      %v1043 = vpop.f32.mrb[0].mxu0
      %v1044 = vadd.f32 %v757, %v1043
      %v1045 = vpop.f32.mrb[0].mxu0
      %v1046 = vadd.f32 %v753, %v1045
      %v1047 = vpop.f32.mrb[0].mxu0
      %v1048 = vadd.f32 %v757, %v1047
      %1049 = vmatprep.mubr.bf16.mxu0 %v911
      %1050 = vmatmul.mubr.bf16.gmra.mrb[0].mxu0 %v704
      %v1051 = vpop.f32.mrb[0].mxu0
      %v1052 = vadd.f32 %v753, %v1051
      %v1053 = vpop.f32.mrb[0].mxu0
      %v1054 = vadd.f32 %v757, %v1053
      %v1055 = vpop.f32.mrb[0].mxu0
      %v1056 = vadd.f32 %v753, %v1055
      %v1057 = vpop.f32.mrb[0].mxu0
      %v1058 = vadd.f32 %v757, %v1057
      %1059 = vmatprep.mubr.bf16.mxu0 %v914
      %1060 = vmatmul.mubr.bf16.gmra.mrb[0].mxu0 %v706
      %v1061 = vpop.f32.mrb[0].mxu0
      %v1062 = vadd.f32 %v753, %v1061
      %v1063 = vpop.f32.mrb[0].mxu0
      %v1064 = vadd.f32 %v757, %v1063
      %v1065 = vpop.f32.mrb[0].mxu0
      %v1066 = vadd.f32 %v753, %v1065
      %v1067 = vpop.f32.mrb[0].mxu0
      %v1068 = vadd.f32 %v757, %v1067
      %1069 = vmatprep.mubr.bf16.mxu0 %v917
      %1070 = vmatmul.mubr.bf16.gmra.mrb[0].mxu0 %v708
      %v1071 = vpop.f32.mrb[0].mxu0
      %v1072 = vadd.f32 %v753, %v1071
      %v1073 = vpop.f32.mrb[0].mxu0
      %v1074 = vadd.f32 %v757, %v1073
      %v1075 = vpop.f32.mrb[0].mxu0
      %v1076 = vadd.f32 %v753, %v1075
      %v1077 = vpop.f32.mrb[0].mxu0
      %v1078 = vadd.f32 %v757, %v1077
      %1079 = vmatprep.mubr.bf16.mxu0 %v920
      %1080 = vmatmul.mubr.bf16.gmra.mrb[0].mxu0 %v710
      %v1081 = vpop.f32.mrb[0].mxu0
      %v1082 = vadd.f32 %v753, %v1081
      %v1083 = vpop.f32.mrb[0].mxu0
      %v1084 = vadd.f32 %v757, %v1083
      %v1085 = vpop.f32.mrb[0].mxu0
      %v1086 = vadd.f32 %v753, %v1085
      %v1087 = vpop.f32.mrb[0].mxu0
      %v1088 = vadd.f32 %v757, %v1087
      %1089 = vmatprep.mubr.bf16.mxu0 %v923
      %1090 = vmatmul.mubr.bf16.gmra.mrb[0].mxu0 %v712
      %v1091 = vpop.f32.mrb[0].mxu0
      %v1092 = vadd.f32 %v753, %v1091
      %v1093 = vpop.f32.mrb[0].mxu0
      %v1094 = vadd.f32 %v757, %v1093
      %v1095 = vpop.f32.mrb[0].mxu0
      %v1096 = vadd.f32 %v753, %v1095
      %v1097 = vpop.f32.mrb[0].mxu0
      %v1098 = vadd.f32 %v757, %v1097
      %1099 = vmatprep.mubr.bf16.mxu0 %v926
      %1100 = vmatmul.mubr.bf16.gmra.mrb[0].mxu0 %v714
      %v1101 = vpop.f32.mrb[0].mxu0
      %v1102 = vadd.f32 %v753, %v1101
      %v1103 = vpop.f32.mrb[0].mxu0
      %v1104 = vadd.f32 %v757, %v1103
      %v1105 = vpop.f32.mrb[0].mxu0
      %v1106 = vadd.f32 %v753, %v1105
      %v1107 = vpop.f32.mrb[0].mxu0
      %v1108 = vadd.f32 %v757, %v1107
      %1109 = vmatprep.mubr.bf16.mxu0 %v929
      %1110 = vmatmul.mubr.bf16.gmra.mrb[0].mxu0 %v716
      %v1111 = vpop.f32.mrb[0].mxu0
      %v1112 = vadd.f32 %v753, %v1111
      %v1113 = vpop.f32.mrb[0].mxu0
      %v1114 = vadd.f32 %v757, %v1113
      %v1115 = vpop.f32.mrb[0].mxu0
      %v1116 = vadd.f32 %v753, %v1115
      %v1117 = vpop.f32.mrb[0].mxu0
      %v1118 = vadd.f32 %v757, %v1117
      %1119 = vmatprep.mubr.bf16.mxu0 %v932
      %1120 = vmatmul.mubr.bf16.gmra.mrb[0].mxu0 %v718
      %v1121 = vpop.f32.mrb[0].mxu0
      %v1122 = vadd.f32 %v753, %v1121
      %v1123 = vpop.f32.mrb[0].mxu0
      %v1124 = vadd.f32 %v757, %v1123
      %v1125 = vpop.f32.mrb[0].mxu0
      %v1126 = vadd.f32 %v753, %v1125
      %v1127 = vpop.f32.mrb[0].mxu0
      %v1128 = vadd.f32 %v757, %v1127
      %1129 = vmatprep.mubr.bf16.mxu0 %v935
      %1130 = vmatmul.mubr.bf16.gmra.mrb[0].mxu0 %v720
      %v1131 = vpop.f32.mrb[0].mxu0
      %v1132 = vadd.f32 %v753, %v1131
      %v1133 = vpop.f32.mrb[0].mxu0
      %v1134 = vadd.f32 %v757, %v1133
      %v1135 = vpop.f32.mrb[0].mxu0
      %v1136 = vadd.f32 %v753, %v1135
      %v1137 = vpop.f32.mrb[0].mxu0
      %v1138 = vadd.f32 %v757, %v1137
      %1139 = vdwg.mxu0
      %s1140 = smul.u32 %s26, 2
      %s1141 = sadd.s32 %s1140, %s27
      %s1142 = smul.u32 %s1141, 256
      %v1143 = vlaneseq
      %v1144 = vshrl.u32 %v1143, 7
      %v1145 = vadd.s32 %v1144, 8
      %v1146 = vadd.s32 %v1144, 16
      %v1147 = vadd.s32 %v1144, 24
      %v1148 = vadd.s32 %v1144, 32
      %v1149 = vadd.s32 %v1144, 40
      %v1150 = vadd.s32 %v1144, 48
      %v1151 = vadd.s32 %v1144, 56
      %v1152 = vadd.s32 %v1144, 64
      %v1153 = vadd.s32 %v1144, 72
      %v1154 = vadd.s32 %v1144, 80
      %v1155 = vadd.s32 %v1144, 88
      %v1156 = vadd.s32 %v1144, 96
      %v1157 = vadd.s32 %v1144, 104
      %v1158 = vadd.s32 %v1144, 112
      %v1159 = vadd.s32 %v1144, 120
      %v1160 = vadd.s32 %v1144, 128
      %v1161 = vadd.s32 %v1144, 136
      %v1162 = vadd.s32 %v1144, 144
      %v1163 = vadd.s32 %v1144, 152
      %v1164 = vadd.s32 %v1144, 160
      %v1165 = vadd.s32 %v1144, 168
      %v1166 = vadd.s32 %v1144, 176
      %v1167 = vadd.s32 %v1144, 184
      %v1168 = vadd.s32 %v1144, 192
      %v1169 = vadd.s32 %v1144, 200
      %v1170 = vadd.s32 %v1144, 208
      %v1171 = vadd.s32 %v1144, 216
      %v1172 = vadd.s32 %v1144, 224
      %v1173 = vadd.s32 %v1144, 232
      %v1174 = vadd.s32 %v1144, 240
      %v1175 = vadd.s32 %v1144, 248
      %v1176 = vstv %s1142
      %v1177 = vadd.s32 %v1176, %v1144
      %v1178 = vadd.s32 %v1176, %v1145
      %v1179 = vadd.s32 %v1176, %v1146
      %v1180 = vadd.s32 %v1176, %v1147
      %v1181 = vadd.s32 %v1176, %v1148
      %v1182 = vadd.s32 %v1176, %v1149
      %v1183 = vadd.s32 %v1176, %v1150
      %v1184 = vadd.s32 %v1176, %v1151
      %v1185 = vadd.s32 %v1176, %v1152
      %v1186 = vadd.s32 %v1176, %v1153
      %v1187 = vadd.s32 %v1176, %v1154
      %v1188 = vadd.s32 %v1176, %v1155
      %v1189 = vadd.s32 %v1176, %v1156
      %v1190 = vadd.s32 %v1176, %v1157
      %v1191 = vadd.s32 %v1176, %v1158
      %v1192 = vadd.s32 %v1176, %v1159
      %v1193 = vadd.s32 %v1176, %v1160
      %v1194 = vadd.s32 %v1176, %v1161
      %v1195 = vadd.s32 %v1176, %v1162
      %v1196 = vadd.s32 %v1176, %v1163
      %v1197 = vadd.s32 %v1176, %v1164
      %v1198 = vadd.s32 %v1176, %v1165
      %v1199 = vadd.s32 %v1176, %v1166
      %v1200 = vadd.s32 %v1176, %v1167
      %v1201 = vadd.s32 %v1176, %v1168
      %v1202 = vadd.s32 %v1176, %v1169
      %v1203 = vadd.s32 %v1176, %v1170
      %v1204 = vadd.s32 %v1176, %v1171
      %v1205 = vadd.s32 %v1176, %v1172
      %v1206 = vadd.s32 %v1176, %v1173
      %v1207 = vadd.s32 %v1176, %v1174
      %v1208 = vadd.s32 %v1176, %v1175
      %vm1209 = vcmp.lt.s32.totalorder %v1177, 600
      %vm1210 = vcmp.lt.s32.totalorder %v1178, 600
      %vm1211 = vcmp.lt.s32.totalorder %v1179, 600
      %vm1212 = vcmp.lt.s32.totalorder %v1180, 600
      %vm1213 = vcmp.lt.s32.totalorder %v1181, 600
      %vm1214 = vcmp.lt.s32.totalorder %v1182, 600
      %vm1215 = vcmp.lt.s32.totalorder %v1183, 600
      %vm1216 = vcmp.lt.s32.totalorder %v1184, 600
      %vm1217 = vcmp.lt.s32.totalorder %v1185, 600
      %vm1218 = vcmp.lt.s32.totalorder %v1186, 600
      %vm1219 = vcmp.lt.s32.totalorder %v1187, 600
      %vm1220 = vcmp.lt.s32.totalorder %v1188, 600
      %vm1221 = vcmp.lt.s32.totalorder %v1189, 600
      %vm1222 = vcmp.lt.s32.totalorder %v1190, 600
      %vm1223 = vcmp.lt.s32.totalorder %v1191, 600
      %vm1224 = vcmp.lt.s32.totalorder %v1192, 600
      %vm1225 = vcmp.lt.s32.totalorder %v1193, 600
      %vm1226 = vcmp.lt.s32.totalorder %v1194, 600
      %vm1227 = vcmp.lt.s32.totalorder %v1195, 600
      %vm1228 = vcmp.lt.s32.totalorder %v1196, 600
      %vm1229 = vcmp.lt.s32.totalorder %v1197, 600
      %vm1230 = vcmp.lt.s32.totalorder %v1198, 600
      %vm1231 = vcmp.lt.s32.totalorder %v1199, 600
      %vm1232 = vcmp.lt.s32.totalorder %v1200, 600
      %vm1233 = vcmp.lt.s32.totalorder %v1201, 600
      %vm1234 = vcmp.lt.s32.totalorder %v1202, 600
      %vm1235 = vcmp.lt.s32.totalorder %v1203, 600
      %vm1236 = vcmp.lt.s32.totalorder %v1204, 600
      %vm1237 = vcmp.lt.s32.totalorder %v1205, 600
      %vm1238 = vcmp.lt.s32.totalorder %v1206, 600
      %vm1239 = vcmp.lt.s32.totalorder %v1207, 600
      %vm1240 = vcmp.lt.s32.totalorder %v1208, 600
      %v1241 = vsub.f32 %v982, %v626
      %v1242 = vsub.f32 %v984, %v627
      %v1243 = vsub.f32 %v986, %v628
      %v1244 = vsub.f32 %v988, %v629
      %v1245 = vsub.f32 %v992, %v630
      %v1246 = vsub.f32 %v994, %v631
      %v1247 = vsub.f32 %v996, %v632
      %v1248 = vsub.f32 %v998, %v633
      %v1249 = vsub.f32 %v1002, %v634
      %v1250 = vsub.f32 %v1004, %v635
      %v1251 = vsub.f32 %v1006, %v636
      %v1252 = vsub.f32 %v1008, %v637
      %v1253 = vsub.f32 %v1012, %v638
      %v1254 = vsub.f32 %v1014, %v639
      %v1255 = vsub.f32 %v1016, %v640
      %v1256 = vsub.f32 %v1018, %v641
      %v1257 = vsub.f32 %v1022, %v642
      %v1258 = vsub.f32 %v1024, %v643
      %v1259 = vsub.f32 %v1026, %v644
      %v1260 = vsub.f32 %v1028, %v645
      %v1261 = vsub.f32 %v1032, %v646
      %v1262 = vsub.f32 %v1034, %v647
      %v1263 = vsub.f32 %v1036, %v648
      %v1264 = vsub.f32 %v1038, %v649
      %v1265 = vsub.f32 %v1042, %v650
      %v1266 = vsub.f32 %v1044, %v651
      %v1267 = vsub.f32 %v1046, %v652
      %v1268 = vsub.f32 %v1048, %v653
      %v1269 = vsub.f32 %v1052, %v654
      %v1270 = vsub.f32 %v1054, %v655
      %v1271 = vsub.f32 %v1056, %v656
      %v1272 = vsub.f32 %v1058, %v657
      %v1273 = vsub.f32 %v1062, %v658
      %v1274 = vsub.f32 %v1064, %v659
      %v1275 = vsub.f32 %v1066, %v660
      %v1276 = vsub.f32 %v1068, %v661
      %v1277 = vsub.f32 %v1072, %v662
      %v1278 = vsub.f32 %v1074, %v663
      %v1279 = vsub.f32 %v1076, %v664
      %v1280 = vsub.f32 %v1078, %v665
      %v1281 = vsub.f32 %v1082, %v666
      %v1282 = vsub.f32 %v1084, %v667
      %v1283 = vsub.f32 %v1086, %v668
      %v1284 = vsub.f32 %v1088, %v669
      %v1285 = vsub.f32 %v1092, %v670
      %v1286 = vsub.f32 %v1094, %v671
      %v1287 = vsub.f32 %v1096, %v672
      %v1288 = vsub.f32 %v1098, %v673
      %v1289 = vsub.f32 %v1102, %v674
      %v1290 = vsub.f32 %v1104, %v675
      %v1291 = vsub.f32 %v1106, %v676
      %v1292 = vsub.f32 %v1108, %v677
      %v1293 = vsub.f32 %v1112, %v678
      %v1294 = vsub.f32 %v1114, %v679
      %v1295 = vsub.f32 %v1116, %v680
      %v1296 = vsub.f32 %v1118, %v681
      %v1297 = vsub.f32 %v1122, %v682
      %v1298 = vsub.f32 %v1124, %v683
      %v1299 = vsub.f32 %v1126, %v684
      %v1300 = vsub.f32 %v1128, %v685
      %v1301 = vsub.f32 %v1132, %v686
      %v1302 = vsub.f32 %v1134, %v687
      %v1303 = vsub.f32 %v1136, %v688
      %v1304 = vsub.f32 %v1138, %v689
      %v1305 = vmul.f32 %v1241, %v1241
      %v1306 = vmul.f32 %v1242, %v1242
      %v1307 = vmul.f32 %v1243, %v1243
      %v1308 = vmul.f32 %v1244, %v1244
      %v1309 = vmul.f32 %v1245, %v1245
      %v1310 = vmul.f32 %v1246, %v1246
      %v1311 = vmul.f32 %v1247, %v1247
      %v1312 = vmul.f32 %v1248, %v1248
      %v1313 = vmul.f32 %v1249, %v1249
      %v1314 = vmul.f32 %v1250, %v1250
      %v1315 = vmul.f32 %v1251, %v1251
      %v1316 = vmul.f32 %v1252, %v1252
      %v1317 = vmul.f32 %v1253, %v1253
      %v1318 = vmul.f32 %v1254, %v1254
      %v1319 = vmul.f32 %v1255, %v1255
      %v1320 = vmul.f32 %v1256, %v1256
      %v1321 = vmul.f32 %v1257, %v1257
      %v1322 = vmul.f32 %v1258, %v1258
      %v1323 = vmul.f32 %v1259, %v1259
      %v1324 = vmul.f32 %v1260, %v1260
      %v1325 = vmul.f32 %v1261, %v1261
      %v1326 = vmul.f32 %v1262, %v1262
      %v1327 = vmul.f32 %v1263, %v1263
      %v1328 = vmul.f32 %v1264, %v1264
      %v1329 = vmul.f32 %v1265, %v1265
      %v1330 = vmul.f32 %v1266, %v1266
      %v1331 = vmul.f32 %v1267, %v1267
      %v1332 = vmul.f32 %v1268, %v1268
      %v1333 = vmul.f32 %v1269, %v1269
      %v1334 = vmul.f32 %v1270, %v1270
      %v1335 = vmul.f32 %v1271, %v1271
      %v1336 = vmul.f32 %v1272, %v1272
      %v1337 = vmul.f32 %v1273, %v1273
      %v1338 = vmul.f32 %v1274, %v1274
      %v1339 = vmul.f32 %v1275, %v1275
      %v1340 = vmul.f32 %v1276, %v1276
      %v1341 = vmul.f32 %v1277, %v1277
      %v1342 = vmul.f32 %v1278, %v1278
      %v1343 = vmul.f32 %v1279, %v1279
      %v1344 = vmul.f32 %v1280, %v1280
      %v1345 = vmul.f32 %v1281, %v1281
      %v1346 = vmul.f32 %v1282, %v1282
      %v1347 = vmul.f32 %v1283, %v1283
      %v1348 = vmul.f32 %v1284, %v1284
      %v1349 = vmul.f32 %v1285, %v1285
      %v1350 = vmul.f32 %v1286, %v1286
      %v1351 = vmul.f32 %v1287, %v1287
      %v1352 = vmul.f32 %v1288, %v1288
      %v1353 = vmul.f32 %v1289, %v1289
      %v1354 = vmul.f32 %v1290, %v1290
      %v1355 = vmul.f32 %v1291, %v1291
      %v1356 = vmul.f32 %v1292, %v1292
      %v1357 = vmul.f32 %v1293, %v1293
      %v1358 = vmul.f32 %v1294, %v1294
      %v1359 = vmul.f32 %v1295, %v1295
      %v1360 = vmul.f32 %v1296, %v1296
      %v1361 = vmul.f32 %v1297, %v1297
      %v1362 = vmul.f32 %v1298, %v1298
      %v1363 = vmul.f32 %v1299, %v1299
      %v1364 = vmul.f32 %v1300, %v1300
      %v1365 = vmul.f32 %v1301, %v1301
      %v1366 = vmul.f32 %v1302, %v1302
      %v1367 = vmul.f32 %v1303, %v1303
      %v1368 = vmul.f32 %v1304, %v1304
      %v1369 = vsel %vm1209, 1, 0
      %v1370 = vsel %vm1210, 1, 0
      %v1371 = vsel %vm1211, 1, 0
      %v1372 = vsel %vm1212, 1, 0
      %v1373 = vsel %vm1213, 1, 0
      %v1374 = vsel %vm1214, 1, 0
      %v1375 = vsel %vm1215, 1, 0
      %v1376 = vsel %vm1216, 1, 0
      %v1377 = vsel %vm1217, 1, 0
      %v1378 = vsel %vm1218, 1, 0
      %v1379 = vsel %vm1219, 1, 0
      %v1380 = vsel %vm1220, 1, 0
      %v1381 = vsel %vm1221, 1, 0
      %v1382 = vsel %vm1222, 1, 0
      %v1383 = vsel %vm1223, 1, 0
      %v1384 = vsel %vm1224, 1, 0
      %v1385 = vsel %vm1225, 1, 0
      %v1386 = vsel %vm1226, 1, 0
      %v1387 = vsel %vm1227, 1, 0
      %v1388 = vsel %vm1228, 1, 0
      %v1389 = vsel %vm1229, 1, 0
      %v1390 = vsel %vm1230, 1, 0
      %v1391 = vsel %vm1231, 1, 0
      %v1392 = vsel %vm1232, 1, 0
      %v1393 = vsel %vm1233, 1, 0
      %v1394 = vsel %vm1234, 1, 0
      %v1395 = vsel %vm1235, 1, 0
      %v1396 = vsel %vm1236, 1, 0
      %v1397 = vsel %vm1237, 1, 0
      %v1398 = vsel %vm1238, 1, 0
      %v1399 = vsel %vm1239, 1, 0
      %v1400 = vsel %vm1240, 1, 0
      %vm1401 = vcmp.eq.s32.totalorder %v1369, 1
      %vm1402 = vcmp.eq.s32.totalorder %v1370, 1
      %vm1403 = vcmp.eq.s32.totalorder %v1371, 1
      %vm1404 = vcmp.eq.s32.totalorder %v1372, 1
      %vm1405 = vcmp.eq.s32.totalorder %v1373, 1
      %vm1406 = vcmp.eq.s32.totalorder %v1374, 1
      %vm1407 = vcmp.eq.s32.totalorder %v1375, 1
      %vm1408 = vcmp.eq.s32.totalorder %v1376, 1
      %vm1409 = vcmp.eq.s32.totalorder %v1377, 1
      %vm1410 = vcmp.eq.s32.totalorder %v1378, 1
      %vm1411 = vcmp.eq.s32.totalorder %v1379, 1
      %vm1412 = vcmp.eq.s32.totalorder %v1380, 1
      %vm1413 = vcmp.eq.s32.totalorder %v1381, 1
      %vm1414 = vcmp.eq.s32.totalorder %v1382, 1
      %vm1415 = vcmp.eq.s32.totalorder %v1383, 1
      %vm1416 = vcmp.eq.s32.totalorder %v1384, 1
      %vm1417 = vcmp.eq.s32.totalorder %v1385, 1
      %vm1418 = vcmp.eq.s32.totalorder %v1386, 1
      %vm1419 = vcmp.eq.s32.totalorder %v1387, 1
      %vm1420 = vcmp.eq.s32.totalorder %v1388, 1
      %vm1421 = vcmp.eq.s32.totalorder %v1389, 1
      %vm1422 = vcmp.eq.s32.totalorder %v1390, 1
      %vm1423 = vcmp.eq.s32.totalorder %v1391, 1
      %vm1424 = vcmp.eq.s32.totalorder %v1392, 1
      %vm1425 = vcmp.eq.s32.totalorder %v1393, 1
      %vm1426 = vcmp.eq.s32.totalorder %v1394, 1
      %vm1427 = vcmp.eq.s32.totalorder %v1395, 1
      %vm1428 = vcmp.eq.s32.totalorder %v1396, 1
      %vm1429 = vcmp.eq.s32.totalorder %v1397, 1
      %vm1430 = vcmp.eq.s32.totalorder %v1398, 1
      %vm1431 = vcmp.eq.s32.totalorder %v1399, 1
      %vm1432 = vcmp.eq.s32.totalorder %v1400, 1
      %v1433 = vsel %vm1401, %v1305, 0.0
      %v1434 = vsel %vm1401, %v1306, 0.0
      %v1435 = vsel %vm1402, %v1307, 0.0
      %v1436 = vsel %vm1402, %v1308, 0.0
      %v1437 = vsel %vm1403, %v1309, 0.0
      %v1438 = vsel %vm1403, %v1310, 0.0
      %v1439 = vsel %vm1404, %v1311, 0.0
      %v1440 = vsel %vm1404, %v1312, 0.0
      %v1441 = vsel %vm1405, %v1313, 0.0
      %v1442 = vsel %vm1405, %v1314, 0.0
      %v1443 = vsel %vm1406, %v1315, 0.0
      %v1444 = vsel %vm1406, %v1316, 0.0
      %v1445 = vsel %vm1407, %v1317, 0.0
      %v1446 = vsel %vm1407, %v1318, 0.0
      %v1447 = vsel %vm1408, %v1319, 0.0
      %v1448 = vsel %vm1408, %v1320, 0.0
      %v1449 = vsel %vm1409, %v1321, 0.0
      %v1450 = vsel %vm1409, %v1322, 0.0
      %v1451 = vsel %vm1410, %v1323, 0.0
      %v1452 = vsel %vm1410, %v1324, 0.0
      %v1453 = vsel %vm1411, %v1325, 0.0
      %v1454 = vsel %vm1411, %v1326, 0.0
      %v1455 = vsel %vm1412, %v1327, 0.0
      %v1456 = vsel %vm1412, %v1328, 0.0
      %v1457 = vsel %vm1413, %v1329, 0.0
      %v1458 = vsel %vm1413, %v1330, 0.0
      %v1459 = vsel %vm1414, %v1331, 0.0
      %v1460 = vsel %vm1414, %v1332, 0.0
      %v1461 = vsel %vm1415, %v1333, 0.0
      %v1462 = vsel %vm1415, %v1334, 0.0
      %v1463 = vsel %vm1416, %v1335, 0.0
      %v1464 = vsel %vm1416, %v1336, 0.0
      %v1465 = vsel %vm1417, %v1337, 0.0
      %v1466 = vsel %vm1417, %v1338, 0.0
      %v1467 = vsel %vm1418, %v1339, 0.0
      %v1468 = vsel %vm1418, %v1340, 0.0
      %v1469 = vsel %vm1419, %v1341, 0.0
      %v1470 = vsel %vm1419, %v1342, 0.0
      %v1471 = vsel %vm1420, %v1343, 0.0
      %v1472 = vsel %vm1420, %v1344, 0.0
      %v1473 = vsel %vm1421, %v1345, 0.0
      %v1474 = vsel %vm1421, %v1346, 0.0
      %v1475 = vsel %vm1422, %v1347, 0.0
      %v1476 = vsel %vm1422, %v1348, 0.0
      %v1477 = vsel %vm1423, %v1349, 0.0
      %v1478 = vsel %vm1423, %v1350, 0.0
      %v1479 = vsel %vm1424, %v1351, 0.0
      %v1480 = vsel %vm1424, %v1352, 0.0
      %v1481 = vsel %vm1425, %v1353, 0.0
      %v1482 = vsel %vm1425, %v1354, 0.0
      %v1483 = vsel %vm1426, %v1355, 0.0
      %v1484 = vsel %vm1426, %v1356, 0.0
      %v1485 = vsel %vm1427, %v1357, 0.0
      %v1486 = vsel %vm1427, %v1358, 0.0
      %v1487 = vsel %vm1428, %v1359, 0.0
      %v1488 = vsel %vm1428, %v1360, 0.0
      %v1489 = vsel %vm1429, %v1361, 0.0
      %v1490 = vsel %vm1429, %v1362, 0.0
      %v1491 = vsel %vm1430, %v1363, 0.0
      %v1492 = vsel %vm1430, %v1364, 0.0
      %v1493 = vsel %vm1431, %v1365, 0.0
      %v1494 = vsel %vm1431, %v1366, 0.0
      %v1495 = vsel %vm1432, %v1367, 0.0
      %v1496 = vsel %vm1432, %v1368, 0.0
      %v1497 = vld [vmem:[%s531] sm:$0x3]
      %v1498 = vadd.f32 %v1433, %v1435
      %v1499 = vadd.f32 %v1498, %v1437
      %v1500 = vadd.f32 %v1499, %v1439
      %v1501 = vadd.f32 %v1500, %v1441
      %v1502 = vadd.f32 %v1501, %v1443
      %v1503 = vadd.f32 %v1502, %v1445
      %v1504 = vadd.f32 %v1503, %v1447
      %v1505 = vadd.f32 %v1504, %v1449
      %v1506 = vadd.f32 %v1505, %v1451
      %v1507 = vadd.f32 %v1506, %v1453
      %v1508 = vadd.f32 %v1507, %v1455
      %v1509 = vadd.f32 %v1508, %v1457
      %v1510 = vadd.f32 %v1509, %v1459
      %v1511 = vadd.f32 %v1510, %v1461
      %v1512 = vadd.f32 %v1511, %v1463
      %v1513 = vadd.f32 %v1512, %v1465
      %v1514 = vadd.f32 %v1513, %v1467
      %v1515 = vadd.f32 %v1514, %v1469
      %v1516 = vadd.f32 %v1515, %v1471
      %v1517 = vadd.f32 %v1516, %v1473
      %v1518 = vadd.f32 %v1517, %v1475
      %v1519 = vadd.f32 %v1518, %v1477
      %v1520 = vadd.f32 %v1519, %v1479
      %v1521 = vadd.f32 %v1520, %v1481
      %v1522 = vadd.f32 %v1521, %v1483
      %v1523 = vadd.f32 %v1522, %v1485
      %v1524 = vadd.f32 %v1523, %v1487
      %v1525 = vadd.f32 %v1524, %v1489
      %v1526 = vadd.f32 %v1525, %v1491
      %v1527 = vadd.f32 %v1526, %v1493
      %v1528 = vadd.f32 %v1527, %v1495
      %v1529 = vrot.slane %v1528, 4
      %v1530 = vadd.f32 %v1528, %v1529
      %v1531 = vrot.slane %v1530, 2
      %v1532 = vadd.f32 %v1530, %v1531
      %v1533 = vrot.slane %v1532, 1
      %v1534 = vadd.f32 %v1532, %v1533
      %v1535 = vsel %vm888, %v1434, 0.0
      %v1536 = vsel %vm888, %v1436, 0.0
      %v1537 = vadd.f32 %v1535, %v1536
      %v1538 = vsel %vm888, %v1438, 0.0
      %v1539 = vadd.f32 %v1537, %v1538
      %v1540 = vsel %vm888, %v1440, 0.0
      %v1541 = vadd.f32 %v1539, %v1540
      %v1542 = vsel %vm888, %v1442, 0.0
      %v1543 = vadd.f32 %v1541, %v1542
      %v1544 = vsel %vm888, %v1444, 0.0
      %v1545 = vadd.f32 %v1543, %v1544
      %v1546 = vsel %vm888, %v1446, 0.0
      %v1547 = vadd.f32 %v1545, %v1546
      %v1548 = vsel %vm888, %v1448, 0.0
      %v1549 = vadd.f32 %v1547, %v1548
      %v1550 = vsel %vm888, %v1450, 0.0
      %v1551 = vadd.f32 %v1549, %v1550
      %v1552 = vsel %vm888, %v1452, 0.0
      %v1553 = vadd.f32 %v1551, %v1552
      %v1554 = vsel %vm888, %v1454, 0.0
      %v1555 = vadd.f32 %v1553, %v1554
      %v1556 = vsel %vm888, %v1456, 0.0
      %v1557 = vadd.f32 %v1555, %v1556
      %v1558 = vsel %vm888, %v1458, 0.0
      %v1559 = vadd.f32 %v1557, %v1558
      %v1560 = vsel %vm888, %v1460, 0.0
      %v1561 = vadd.f32 %v1559, %v1560
      %v1562 = vsel %vm888, %v1462, 0.0
      %v1563 = vadd.f32 %v1561, %v1562
      %v1564 = vsel %vm888, %v1464, 0.0
      %v1565 = vadd.f32 %v1563, %v1564
      %v1566 = vsel %vm888, %v1466, 0.0
      %v1567 = vadd.f32 %v1565, %v1566
      %v1568 = vsel %vm888, %v1468, 0.0
      %v1569 = vadd.f32 %v1567, %v1568
      %v1570 = vsel %vm888, %v1470, 0.0
      %v1571 = vadd.f32 %v1569, %v1570
      %v1572 = vsel %vm888, %v1472, 0.0
      %v1573 = vadd.f32 %v1571, %v1572
      %v1574 = vsel %vm888, %v1474, 0.0
      %v1575 = vadd.f32 %v1573, %v1574
      %v1576 = vsel %vm888, %v1476, 0.0
      %v1577 = vadd.f32 %v1575, %v1576
      %v1578 = vsel %vm888, %v1478, 0.0
      %v1579 = vadd.f32 %v1577, %v1578
      %v1580 = vsel %vm888, %v1480, 0.0
      %v1581 = vadd.f32 %v1579, %v1580
      %v1582 = vsel %vm888, %v1482, 0.0
      %v1583 = vadd.f32 %v1581, %v1582
      %v1584 = vsel %vm888, %v1484, 0.0
      %v1585 = vadd.f32 %v1583, %v1584
      %v1586 = vsel %vm888, %v1486, 0.0
      %v1587 = vadd.f32 %v1585, %v1586
      %v1588 = vsel %vm888, %v1488, 0.0
      %v1589 = vadd.f32 %v1587, %v1588
      %v1590 = vsel %vm888, %v1490, 0.0
      %v1591 = vadd.f32 %v1589, %v1590
      %v1592 = vsel %vm888, %v1492, 0.0
      %v1593 = vadd.f32 %v1591, %v1592
      %v1594 = vsel %vm888, %v1494, 0.0
      %v1595 = vadd.f32 %v1593, %v1594
      %v1596 = vsel %vm888, %v1496, 0.0
      %v1597 = vadd.f32 %v1595, %v1596
      %v1598 = vrot.slane %v1597, 4
      %v1599 = vadd.f32 %v1597, %v1598
      %v1600 = vrot.slane %v1599, 2
      %v1601 = vadd.f32 %v1599, %v1600
      %v1602 = vrot.slane %v1601, 1
      %v1603 = vadd.f32 %v1601, %v1602
      %v1606 = vcombine.low %v1534, %v1603
      %v1608 = vunpack.c.l.s4 1966171168
      %v1609 = vunpack.c.0.s8 %v1608
      %v1610 = vlaneseq
      %v1611 = vshrl.u32 %v1610, 7
      %v1612 = vsub.s32 %v1609, %v1611
      %v1613 = vrot.slane %v1606, %v1612
      %v1615 = vunpack.c.l.s4 1966171168
      %v1616 = vunpack.c.0.s8 %v1615
      %v1617 = vlaneseq
      %v1618 = vshrl.u32 %v1617, 7
      %v1619 = vsub.s32 %v1616, %v1618
      %v1620 = vrot.slane %v1613, %v1619
      %v1622 = vadd.f32 %v1497, %v1620
      %v1623 = vlaneseq
      %vm1624 = vcmp.ge.s32.totalorder %v1623, 0
      %vm1625 = vcmp.lt.s32.totalorder %v1623, 201
      %vm1626 = vmand %vm1624, %vm1625
      %1627 = vst.msk [vmem:[%s531] sm:$0x3] %vm1626, %v1622
      %v1628 = vld [vmem:[%s4] sm:$0xf]
      %v1629 = vld [vmem:[%s4 + $0x4] sm:$0xf]
      %v1630 = vld [vmem:[%s4 + $0x8] sm:$0xf]
      %v1631 = vld [vmem:[%s4 + $0xc] sm:$0xf]
      %v1632 = vld [vmem:[%s4 + $0x10] sm:$0xf]
      %v1633 = vld [vmem:[%s4 + $0x14] sm:$0xf]
      %v1634 = vld [vmem:[%s4 + $0x18] sm:$0xf]
      %v1635 = vld [vmem:[%s4 + $0x1c] sm:$0xf]
      %v1636 = vld [vmem:[%s4 + $0x20] sm:$0xf]
      %v1637 = vld [vmem:[%s4 + $0x24] sm:$0xf]
      %v1638 = vld [vmem:[%s4 + $0x28] sm:$0xf]
      %v1639 = vld [vmem:[%s4 + $0x2c] sm:$0xf]
      %v1640 = vld [vmem:[%s4 + $0x30] sm:$0xf]
      %v1641 = vld [vmem:[%s4 + $0x34] sm:$0xf]
      %v1642 = vld [vmem:[%s4 + $0x38] sm:$0xf]
      %v1643 = vld [vmem:[%s4 + $0x3c] sm:$0xf]
      %v1644 = vld [vmem:[%s4 + $0x40] sm:$0xf]
      %v1645 = vld [vmem:[%s4 + $0x44] sm:$0xf]
      %v1646 = vld [vmem:[%s4 + $0x48] sm:$0xf]
      %v1647 = vld [vmem:[%s4 + $0x4c] sm:$0xf]
      %v1648 = vld [vmem:[%s4 + $0x50] sm:$0xf]
      %v1649 = vld [vmem:[%s4 + $0x54] sm:$0xf]
      %v1650 = vld [vmem:[%s4 + $0x58] sm:$0xf]
      %v1651 = vld [vmem:[%s4 + $0x5c] sm:$0xf]
      %v1652 = vld [vmem:[%s4 + $0x60] sm:$0xf]
      %v1653 = vld [vmem:[%s4 + $0x64] sm:$0x1]
      %v1654 = vpack.c.bf16 %v986, %v982
      %v1655 = vpack.c.bf16 %v988, %v984
      %v1656 = vpack.c.bf16 %v996, %v992
      %v1657 = vpack.c.bf16 %v998, %v994
      %v1658 = vpack.c.bf16 %v1006, %v1002
      %v1659 = vpack.c.bf16 %v1008, %v1004
      %v1660 = vpack.c.bf16 %v1016, %v1012
      %v1661 = vpack.c.bf16 %v1018, %v1014
      %v1662 = vpack.c.bf16 %v1026, %v1022
      %v1663 = vpack.c.bf16 %v1028, %v1024
      %v1664 = vpack.c.bf16 %v1036, %v1032
      %v1665 = vpack.c.bf16 %v1038, %v1034
      %v1666 = vpack.c.bf16 %v1046, %v1042
      %v1667 = vpack.c.bf16 %v1048, %v1044
      %v1668 = vpack.c.bf16 %v1056, %v1052
      %v1669 = vpack.c.bf16 %v1058, %v1054
      %v1670 = vpack.c.bf16 %v1066, %v1062
      %v1671 = vpack.c.bf16 %v1068, %v1064
      %v1672 = vpack.c.bf16 %v1076, %v1072
      %v1673 = vpack.c.bf16 %v1078, %v1074
      %v1674 = vpack.c.bf16 %v1086, %v1082
      %v1675 = vpack.c.bf16 %v1088, %v1084
      %v1676 = vpack.c.bf16 %v1096, %v1092
      %v1677 = vpack.c.bf16 %v1098, %v1094
      %v1678 = vpack.c.bf16 %v1106, %v1102
      %v1679 = vpack.c.bf16 %v1108, %v1104
      %v1680 = vpack.c.bf16 %v1116, %v1112
      %v1681 = vpack.c.bf16 %v1118, %v1114
      %v1682 = vpack.c.bf16 %v1126, %v1122
      %v1683 = vpack.c.bf16 %v1128, %v1124
      %v1684 = vpack.c.bf16 %v1136, %v1132
      %v1685 = vpack.c.bf16 %v1138, %v1134
      %v1712 = vunpack.c.l.b16 %v1628
      %v1713 = vunpack.c.l.b16 %v1629
      %v1714 = vunpack.c.l.b16 %v1630
      %v1715 = vunpack.c.l.b16 %v1631
      %v1716 = vunpack.c.l.b16 %v1632
      %v1717 = vunpack.c.l.b16 %v1633
      %v1718 = vunpack.c.l.b16 %v1634
      %v1719 = vunpack.c.l.b16 %v1635
      %v1720 = vunpack.c.l.b16 %v1636
      %v1721 = vunpack.c.l.b16 %v1637
      %v1722 = vunpack.c.l.b16 %v1638
      %v1723 = vunpack.c.l.b16 %v1639
      %v1724 = vunpack.c.l.b16 %v1640
      %v1725 = vunpack.c.l.b16 %v1641
      %v1726 = vunpack.c.l.b16 %v1642
      %v1727 = vunpack.c.l.b16 %v1643
      %v1728 = vunpack.c.l.b16 %v1644
      %v1729 = vunpack.c.l.b16 %v1645
      %v1730 = vunpack.c.l.b16 %v1646
      %v1731 = vunpack.c.l.b16 %v1647
      %v1732 = vunpack.c.l.b16 %v1648
      %v1733 = vunpack.c.l.b16 %v1649
      %v1734 = vunpack.c.l.b16 %v1650
      %v1735 = vunpack.c.l.b16 %v1651
      %v1736 = vunpack.c.l.b16 %v1652
      %v1737 = vunpack.c.l.b16 %v1653
      %v1738 = vpack.c.b16 %v1713, %v1712
      %v1739 = vpack.c.b16 %v1715, %v1714
      %v1740 = vpack.c.b16 %v1717, %v1716
      %v1741 = vpack.c.b16 %v1719, %v1718
      %v1742 = vpack.c.b16 %v1721, %v1720
      %v1743 = vpack.c.b16 %v1723, %v1722
      %v1744 = vpack.c.b16 %v1725, %v1724
      %v1745 = vpack.c.b16 %v1727, %v1726
      %v1746 = vpack.c.b16 %v1729, %v1728
      %v1747 = vpack.c.b16 %v1731, %v1730
      %v1748 = vpack.c.b16 %v1733, %v1732
      %v1749 = vpack.c.b16 %v1735, %v1734
      %v1750 = vpack.c.b16 %v1737, %v1736
      %v1764 = vsel %vm888, %v1655, 0
      %v1767 = vsel %vm888, %v1657, 0
      %v1770 = vsel %vm888, %v1659, 0
      %v1773 = vsel %vm888, %v1661, 0
      %v1776 = vsel %vm888, %v1663, 0
      %v1779 = vsel %vm888, %v1665, 0
      %v1782 = vsel %vm888, %v1667, 0
      %v1785 = vsel %vm888, %v1669, 0
      %v1788 = vsel %vm888, %v1671, 0
      %v1791 = vsel %vm888, %v1673, 0
      %v1794 = vsel %vm888, %v1675, 0
      %v1797 = vsel %vm888, %v1677, 0
      %v1800 = vsel %vm888, %v1679, 0
      %v1803 = vsel %vm888, %v1681, 0
      %v1806 = vsel %vm888, %v1683, 0
      %v1809 = vsel %vm888, %v1685, 0
      %v1812 = vand.u32 %v1750, %v940
      %1814 = vmatprep.subr.bf16.mxu0 0
      %1815 = vmatpush1.bf16.msra.mxu0 %v1738
      %1816 = vmatprep.subr.bf16.mxu0 0
      %1817 = vmatpush1.bf16.msra.mxu0 %v1739
      %1818 = vmatprep.subr.bf16.mxu0 0
      %1819 = vmatpush1.bf16.msra.mxu0 %v1740
      %1820 = vmatprep.subr.bf16.mxu0 0
      %1821 = vmatpush1.bf16.msra.mxu0 %v1741
      %1822 = vmatprep.subr.bf16.mxu0 0
      %1823 = vmatpush1.bf16.msra.mxu0 %v1742
      %1824 = vmatprep.subr.bf16.mxu0 0
      %1825 = vmatpush1.bf16.msra.mxu0 %v1743
      %1826 = vmatprep.subr.bf16.mxu0 0
      %1827 = vmatpush1.bf16.msra.mxu0 %v1744
      %1828 = vmatprep.subr.bf16.mxu0 0
      %1829 = vmatpush1.bf16.msra.mxu0 %v1745
      %1830 = vmatprep.subr.bf16.mxu0 0
      %1831 = vmatpush1.bf16.msra.mxu0 %v1746
      %1832 = vmatprep.subr.bf16.mxu0 0
      %1833 = vmatpush1.bf16.msra.mxu0 %v1747
      %1834 = vmatprep.subr.bf16.mxu0 0
      %1835 = vmatpush1.bf16.msra.mxu0 %v1748
      %1836 = vmatprep.subr.bf16.mxu0 0
      %1837 = vmatpush1.bf16.msra.mxu0 %v1749
      %1838 = vmatprep.subr.bf16.mxu0 0
      %1839 = vmatpush1.bf16.msra.mxu0 %v1812
      %1840 = vmatprep.subr.bf16.mxu0 0
      %1841 = vmatpush1.bf16.msra.mxu0 0
      %1842 = vmatprep.subr.bf16.mxu0 0
      %1843 = vmatpush1.bf16.msra.mxu0 0
      %1844 = vmatprep.subr.bf16.mxu0 0
      %1845 = vmatpush1.bf16.msra.mxu0 0
      %1846 = vmatprep.mubr.bf16.mxu0 %v1764
      %1847 = vmatmul.mubr.bf16.gmra.mrb[0].mxu0 %v1654
      %v1848 = vpop.f32.mrb[0].mxu0
      %v1849 = vadd.f32 0.0, %v1848
      %v1850 = vpop.f32.mrb[0].mxu0
      %v1851 = vpop.f32.mrb[0].mxu0
      %v1852 = vadd.f32 0.0, %v1851
      %v1853 = vpop.f32.mrb[0].mxu0
      %1854 = vmatprep.mubr.bf16.mxu0 %v1767
      %1855 = vmatmul.mubr.bf16.gmra.mrb[0].mxu0 %v1656
      %v1856 = vpop.f32.mrb[0].mxu0
      %v1857 = vadd.f32 0.0, %v1856
      %v1858 = vpop.f32.mrb[0].mxu0
      %v1859 = vpop.f32.mrb[0].mxu0
      %v1860 = vadd.f32 0.0, %v1859
      %v1861 = vpop.f32.mrb[0].mxu0
      %1862 = vmatprep.mubr.bf16.mxu0 %v1770
      %1863 = vmatmul.mubr.bf16.gmra.mrb[0].mxu0 %v1658
      %v1864 = vpop.f32.mrb[0].mxu0
      %v1865 = vadd.f32 0.0, %v1864
      %v1866 = vpop.f32.mrb[0].mxu0
      %v1867 = vpop.f32.mrb[0].mxu0
      %v1868 = vadd.f32 0.0, %v1867
      %v1869 = vpop.f32.mrb[0].mxu0
      %1870 = vmatprep.mubr.bf16.mxu0 %v1773
      %1871 = vmatmul.mubr.bf16.gmra.mrb[0].mxu0 %v1660
      %v1872 = vpop.f32.mrb[0].mxu0
      %v1873 = vadd.f32 0.0, %v1872
      %v1874 = vpop.f32.mrb[0].mxu0
      %v1875 = vpop.f32.mrb[0].mxu0
      %v1876 = vadd.f32 0.0, %v1875
      %v1877 = vpop.f32.mrb[0].mxu0
      %1878 = vmatprep.mubr.bf16.mxu0 %v1776
      %1879 = vmatmul.mubr.bf16.gmra.mrb[0].mxu0 %v1662
      %v1880 = vpop.f32.mrb[0].mxu0
      %v1881 = vadd.f32 0.0, %v1880
      %v1882 = vpop.f32.mrb[0].mxu0
      %v1883 = vpop.f32.mrb[0].mxu0
      %v1884 = vadd.f32 0.0, %v1883
      %v1885 = vpop.f32.mrb[0].mxu0
      %1886 = vmatprep.mubr.bf16.mxu0 %v1779
      %1887 = vmatmul.mubr.bf16.gmra.mrb[0].mxu0 %v1664
      %v1888 = vpop.f32.mrb[0].mxu0
      %v1889 = vadd.f32 0.0, %v1888
      %v1890 = vpop.f32.mrb[0].mxu0
      %v1891 = vpop.f32.mrb[0].mxu0
      %v1892 = vadd.f32 0.0, %v1891
      %v1893 = vpop.f32.mrb[0].mxu0
      %1894 = vmatprep.mubr.bf16.mxu0 %v1782
      %1895 = vmatmul.mubr.bf16.gmra.mrb[0].mxu0 %v1666
      %v1896 = vpop.f32.mrb[0].mxu0
      %v1897 = vadd.f32 0.0, %v1896
      %v1898 = vpop.f32.mrb[0].mxu0
      %v1899 = vpop.f32.mrb[0].mxu0
      %v1900 = vadd.f32 0.0, %v1899
      %v1901 = vpop.f32.mrb[0].mxu0
      %1902 = vmatprep.mubr.bf16.mxu0 %v1785
      %1903 = vmatmul.mubr.bf16.gmra.mrb[0].mxu0 %v1668
      %v1904 = vpop.f32.mrb[0].mxu0
      %v1905 = vadd.f32 0.0, %v1904
      %v1906 = vpop.f32.mrb[0].mxu0
      %v1907 = vpop.f32.mrb[0].mxu0
      %v1908 = vadd.f32 0.0, %v1907
      %v1909 = vpop.f32.mrb[0].mxu0
      %1910 = vmatprep.mubr.bf16.mxu0 %v1788
      %1911 = vmatmul.mubr.bf16.gmra.mrb[0].mxu0 %v1670
      %v1912 = vpop.f32.mrb[0].mxu0
      %v1913 = vadd.f32 0.0, %v1912
      %v1914 = vpop.f32.mrb[0].mxu0
      %v1915 = vpop.f32.mrb[0].mxu0
      %v1916 = vadd.f32 0.0, %v1915
      %v1917 = vpop.f32.mrb[0].mxu0
      %1918 = vmatprep.mubr.bf16.mxu0 %v1791
      %1919 = vmatmul.mubr.bf16.gmra.mrb[0].mxu0 %v1672
      %v1920 = vpop.f32.mrb[0].mxu0
      %v1921 = vadd.f32 0.0, %v1920
      %v1922 = vpop.f32.mrb[0].mxu0
      %v1923 = vpop.f32.mrb[0].mxu0
      %v1924 = vadd.f32 0.0, %v1923
      %v1925 = vpop.f32.mrb[0].mxu0
      %1926 = vmatprep.mubr.bf16.mxu0 %v1794
      %1927 = vmatmul.mubr.bf16.gmra.mrb[0].mxu0 %v1674
      %v1928 = vpop.f32.mrb[0].mxu0
      %v1929 = vadd.f32 0.0, %v1928
      %v1930 = vpop.f32.mrb[0].mxu0
      %v1931 = vpop.f32.mrb[0].mxu0
      %v1932 = vadd.f32 0.0, %v1931
      %v1933 = vpop.f32.mrb[0].mxu0
      %1934 = vmatprep.mubr.bf16.mxu0 %v1797
      %1935 = vmatmul.mubr.bf16.gmra.mrb[0].mxu0 %v1676
      %v1936 = vpop.f32.mrb[0].mxu0
      %v1937 = vadd.f32 0.0, %v1936
      %v1938 = vpop.f32.mrb[0].mxu0
      %v1939 = vpop.f32.mrb[0].mxu0
      %v1940 = vadd.f32 0.0, %v1939
      %v1941 = vpop.f32.mrb[0].mxu0
      %1942 = vmatprep.mubr.bf16.mxu0 %v1800
      %1943 = vmatmul.mubr.bf16.gmra.mrb[0].mxu0 %v1678
      %v1944 = vpop.f32.mrb[0].mxu0
      %v1945 = vadd.f32 0.0, %v1944
      %v1946 = vpop.f32.mrb[0].mxu0
      %v1947 = vpop.f32.mrb[0].mxu0
      %v1948 = vadd.f32 0.0, %v1947
      %v1949 = vpop.f32.mrb[0].mxu0
      %1950 = vmatprep.mubr.bf16.mxu0 %v1803
      %1951 = vmatmul.mubr.bf16.gmra.mrb[0].mxu0 %v1680
      %v1952 = vpop.f32.mrb[0].mxu0
      %v1953 = vadd.f32 0.0, %v1952
      %v1954 = vpop.f32.mrb[0].mxu0
      %v1955 = vpop.f32.mrb[0].mxu0
      %v1956 = vadd.f32 0.0, %v1955
      %v1957 = vpop.f32.mrb[0].mxu0
      %1958 = vmatprep.mubr.bf16.mxu0 %v1806
      %1959 = vmatmul.mubr.bf16.gmra.mrb[0].mxu0 %v1682
      %v1960 = vpop.f32.mrb[0].mxu0
      %v1961 = vadd.f32 0.0, %v1960
      %v1962 = vpop.f32.mrb[0].mxu0
      %v1963 = vpop.f32.mrb[0].mxu0
      %v1964 = vadd.f32 0.0, %v1963
      %v1965 = vpop.f32.mrb[0].mxu0
      %1966 = vmatprep.mubr.bf16.mxu0 %v1809
      %1967 = vmatmul.mubr.bf16.gmra.mrb[0].mxu0 %v1684
      %v1968 = vpop.f32.mrb[0].mxu0
      %v1969 = vadd.f32 0.0, %v1968
      %v1970 = vpop.f32.mrb[0].mxu0
      %v1971 = vpop.f32.mrb[0].mxu0
      %v1972 = vadd.f32 0.0, %v1971
      %v1973 = vpop.f32.mrb[0].mxu0
      %1974 = vdwg.mxu0
      %v1975 = vpack.c.bf16 %v628, %v626
      %v1976 = vpack.c.bf16 %v629, %v627
      %v1977 = vpack.c.bf16 %v632, %v630
      %v1978 = vpack.c.bf16 %v633, %v631
      %v1979 = vpack.c.bf16 %v636, %v634
      %v1980 = vpack.c.bf16 %v637, %v635
      %v1981 = vpack.c.bf16 %v640, %v638
      %v1982 = vpack.c.bf16 %v641, %v639
      %v1983 = vpack.c.bf16 %v644, %v642
      %v1984 = vpack.c.bf16 %v645, %v643
      %v1985 = vpack.c.bf16 %v648, %v646
      %v1986 = vpack.c.bf16 %v649, %v647
      %v1987 = vpack.c.bf16 %v652, %v650
      %v1988 = vpack.c.bf16 %v653, %v651
      %v1989 = vpack.c.bf16 %v656, %v654
      %v1990 = vpack.c.bf16 %v657, %v655
      %v1991 = vpack.c.bf16 %v660, %v658
      %v1992 = vpack.c.bf16 %v661, %v659
      %v1993 = vpack.c.bf16 %v664, %v662
      %v1994 = vpack.c.bf16 %v665, %v663
      %v1995 = vpack.c.bf16 %v668, %v666
      %v1996 = vpack.c.bf16 %v669, %v667
      %v1997 = vpack.c.bf16 %v672, %v670
      %v1998 = vpack.c.bf16 %v673, %v671
      %v1999 = vpack.c.bf16 %v676, %v674
      %v2000 = vpack.c.bf16 %v677, %v675
      %v2001 = vpack.c.bf16 %v680, %v678
      %v2002 = vpack.c.bf16 %v681, %v679
      %v2003 = vpack.c.bf16 %v684, %v682
      %v2004 = vpack.c.bf16 %v685, %v683
      %v2005 = vpack.c.bf16 %v688, %v686
      %v2006 = vpack.c.bf16 %v689, %v687
      %v2008 = vsel %vm888, %v1976, 0
      %v2011 = vsel %vm888, %v1978, 0
      %v2014 = vsel %vm888, %v1980, 0
      %v2017 = vsel %vm888, %v1982, 0
      %v2020 = vsel %vm888, %v1984, 0
      %v2023 = vsel %vm888, %v1986, 0
      %v2026 = vsel %vm888, %v1988, 0
      %v2029 = vsel %vm888, %v1990, 0
      %v2032 = vsel %vm888, %v1992, 0
      %v2035 = vsel %vm888, %v1994, 0
      %v2038 = vsel %vm888, %v1996, 0
      %v2041 = vsel %vm888, %v1998, 0
      %v2044 = vsel %vm888, %v2000, 0
      %v2047 = vsel %vm888, %v2002, 0
      %v2050 = vsel %vm888, %v2004, 0
      %v2053 = vsel %vm888, %v2006, 0
      %2055 = vmatprep.subr.bf16.mxu0 0
      %2056 = vmatpush1.bf16.msra.mxu0 %v1738
      %2057 = vmatprep.subr.bf16.mxu0 0
      %2058 = vmatpush1.bf16.msra.mxu0 %v1739
      %2059 = vmatprep.subr.bf16.mxu0 0
      %2060 = vmatpush1.bf16.msra.mxu0 %v1740
      %2061 = vmatprep.subr.bf16.mxu0 0
      %2062 = vmatpush1.bf16.msra.mxu0 %v1741
      %2063 = vmatprep.subr.bf16.mxu0 0
      %2064 = vmatpush1.bf16.msra.mxu0 %v1742
      %2065 = vmatprep.subr.bf16.mxu0 0
      %2066 = vmatpush1.bf16.msra.mxu0 %v1743
      %2067 = vmatprep.subr.bf16.mxu0 0
      %2068 = vmatpush1.bf16.msra.mxu0 %v1744
      %2069 = vmatprep.subr.bf16.mxu0 0
      %2070 = vmatpush1.bf16.msra.mxu0 %v1745
      %2071 = vmatprep.subr.bf16.mxu0 0
      %2072 = vmatpush1.bf16.msra.mxu0 %v1746
      %2073 = vmatprep.subr.bf16.mxu0 0
      %2074 = vmatpush1.bf16.msra.mxu0 %v1747
      %2075 = vmatprep.subr.bf16.mxu0 0
      %2076 = vmatpush1.bf16.msra.mxu0 %v1748
      %2077 = vmatprep.subr.bf16.mxu0 0
      %2078 = vmatpush1.bf16.msra.mxu0 %v1749
      %2079 = vmatprep.subr.bf16.mxu0 0
      %2080 = vmatpush1.bf16.msra.mxu0 %v1812
      %2081 = vmatprep.subr.bf16.mxu0 0
      %2082 = vmatpush1.bf16.msra.mxu0 0
      %2083 = vmatprep.subr.bf16.mxu0 0
      %2084 = vmatpush1.bf16.msra.mxu0 0
      %2085 = vmatprep.subr.bf16.mxu0 0
      %2086 = vmatpush1.bf16.msra.mxu0 0
      %2087 = vmatprep.mubr.bf16.mxu0 %v2008
      %2088 = vmatmul.mubr.bf16.gmra.mrb[0].mxu0 %v1975
      %v2089 = vpop.f32.mrb[0].mxu0
      %v2090 = vadd.f32 0.0, %v2089
      %v2091 = vpop.f32.mrb[0].mxu0
      %v2092 = vpop.f32.mrb[0].mxu0
      %v2093 = vadd.f32 0.0, %v2092
      %v2094 = vpop.f32.mrb[0].mxu0
      %2095 = vmatprep.mubr.bf16.mxu0 %v2011
      %2096 = vmatmul.mubr.bf16.gmra.mrb[0].mxu0 %v1977
      %v2097 = vpop.f32.mrb[0].mxu0
      %v2098 = vadd.f32 0.0, %v2097
      %v2099 = vpop.f32.mrb[0].mxu0
      %v2100 = vpop.f32.mrb[0].mxu0
      %v2101 = vadd.f32 0.0, %v2100
      %v2102 = vpop.f32.mrb[0].mxu0
      %2103 = vmatprep.mubr.bf16.mxu0 %v2014
      %2104 = vmatmul.mubr.bf16.gmra.mrb[0].mxu0 %v1979
      %v2105 = vpop.f32.mrb[0].mxu0
      %v2106 = vadd.f32 0.0, %v2105
      %v2107 = vpop.f32.mrb[0].mxu0
      %v2108 = vpop.f32.mrb[0].mxu0
      %v2109 = vadd.f32 0.0, %v2108
      %v2110 = vpop.f32.mrb[0].mxu0
      %2111 = vmatprep.mubr.bf16.mxu0 %v2017
      %2112 = vmatmul.mubr.bf16.gmra.mrb[0].mxu0 %v1981
      %v2113 = vpop.f32.mrb[0].mxu0
      %v2114 = vadd.f32 0.0, %v2113
      %v2115 = vpop.f32.mrb[0].mxu0
      %v2116 = vpop.f32.mrb[0].mxu0
      %v2117 = vadd.f32 0.0, %v2116
      %v2118 = vpop.f32.mrb[0].mxu0
      %2119 = vmatprep.mubr.bf16.mxu0 %v2020
      %2120 = vmatmul.mubr.bf16.gmra.mrb[0].mxu0 %v1983
      %v2121 = vpop.f32.mrb[0].mxu0
      %v2122 = vadd.f32 0.0, %v2121
      %v2123 = vpop.f32.mrb[0].mxu0
      %v2124 = vpop.f32.mrb[0].mxu0
      %v2125 = vadd.f32 0.0, %v2124
      %v2126 = vpop.f32.mrb[0].mxu0
      %2127 = vmatprep.mubr.bf16.mxu0 %v2023
      %2128 = vmatmul.mubr.bf16.gmra.mrb[0].mxu0 %v1985
      %v2129 = vpop.f32.mrb[0].mxu0
      %v2130 = vadd.f32 0.0, %v2129
      %v2131 = vpop.f32.mrb[0].mxu0
      %v2132 = vpop.f32.mrb[0].mxu0
      %v2133 = vadd.f32 0.0, %v2132
      %v2134 = vpop.f32.mrb[0].mxu0
      %2135 = vmatprep.mubr.bf16.mxu0 %v2026
      %2136 = vmatmul.mubr.bf16.gmra.mrb[0].mxu0 %v1987
      %v2137 = vpop.f32.mrb[0].mxu0
      %v2138 = vadd.f32 0.0, %v2137
      %v2139 = vpop.f32.mrb[0].mxu0
      %v2140 = vpop.f32.mrb[0].mxu0
      %v2141 = vadd.f32 0.0, %v2140
      %v2142 = vpop.f32.mrb[0].mxu0
      %2143 = vmatprep.mubr.bf16.mxu0 %v2029
      %2144 = vmatmul.mubr.bf16.gmra.mrb[0].mxu0 %v1989
      %v2145 = vpop.f32.mrb[0].mxu0
      %v2146 = vadd.f32 0.0, %v2145
      %v2147 = vpop.f32.mrb[0].mxu0
      %v2148 = vpop.f32.mrb[0].mxu0
      %v2149 = vadd.f32 0.0, %v2148
      %v2150 = vpop.f32.mrb[0].mxu0
      %2151 = vmatprep.mubr.bf16.mxu0 %v2032
      %2152 = vmatmul.mubr.bf16.gmra.mrb[0].mxu0 %v1991
      %v2153 = vpop.f32.mrb[0].mxu0
      %v2154 = vadd.f32 0.0, %v2153
      %v2155 = vpop.f32.mrb[0].mxu0
      %v2156 = vpop.f32.mrb[0].mxu0
      %v2157 = vadd.f32 0.0, %v2156
      %v2158 = vpop.f32.mrb[0].mxu0
      %2159 = vmatprep.mubr.bf16.mxu0 %v2035
      %2160 = vmatmul.mubr.bf16.gmra.mrb[0].mxu0 %v1993
      %v2161 = vpop.f32.mrb[0].mxu0
      %v2162 = vadd.f32 0.0, %v2161
      %v2163 = vpop.f32.mrb[0].mxu0
      %v2164 = vpop.f32.mrb[0].mxu0
      %v2165 = vadd.f32 0.0, %v2164
      %v2166 = vpop.f32.mrb[0].mxu0
      %2167 = vmatprep.mubr.bf16.mxu0 %v2038
      %2168 = vmatmul.mubr.bf16.gmra.mrb[0].mxu0 %v1995
      %v2169 = vpop.f32.mrb[0].mxu0
      %v2170 = vadd.f32 0.0, %v2169
      %v2171 = vpop.f32.mrb[0].mxu0
      %v2172 = vpop.f32.mrb[0].mxu0
      %v2173 = vadd.f32 0.0, %v2172
      %v2174 = vpop.f32.mrb[0].mxu0
      %2175 = vmatprep.mubr.bf16.mxu0 %v2041
      %2176 = vmatmul.mubr.bf16.gmra.mrb[0].mxu0 %v1997
      %v2177 = vpop.f32.mrb[0].mxu0
      %v2178 = vadd.f32 0.0, %v2177
      %v2179 = vpop.f32.mrb[0].mxu0
      %v2180 = vpop.f32.mrb[0].mxu0
      %v2181 = vadd.f32 0.0, %v2180
      %v2182 = vpop.f32.mrb[0].mxu0
      %2183 = vmatprep.mubr.bf16.mxu0 %v2044
      %2184 = vmatmul.mubr.bf16.gmra.mrb[0].mxu0 %v1999
      %v2185 = vpop.f32.mrb[0].mxu0
      %v2186 = vadd.f32 0.0, %v2185
      %v2187 = vpop.f32.mrb[0].mxu0
      %v2188 = vpop.f32.mrb[0].mxu0
      %v2189 = vadd.f32 0.0, %v2188
      %v2190 = vpop.f32.mrb[0].mxu0
      %2191 = vmatprep.mubr.bf16.mxu0 %v2047
      %2192 = vmatmul.mubr.bf16.gmra.mrb[0].mxu0 %v2001
      %v2193 = vpop.f32.mrb[0].mxu0
      %v2194 = vadd.f32 0.0, %v2193
      %v2195 = vpop.f32.mrb[0].mxu0
      %v2196 = vpop.f32.mrb[0].mxu0
      %v2197 = vadd.f32 0.0, %v2196
      %v2198 = vpop.f32.mrb[0].mxu0
      %2199 = vmatprep.mubr.bf16.mxu0 %v2050
      %2200 = vmatmul.mubr.bf16.gmra.mrb[0].mxu0 %v2003
      %v2201 = vpop.f32.mrb[0].mxu0
      %v2202 = vadd.f32 0.0, %v2201
      %v2203 = vpop.f32.mrb[0].mxu0
      %v2204 = vpop.f32.mrb[0].mxu0
      %v2205 = vadd.f32 0.0, %v2204
      %v2206 = vpop.f32.mrb[0].mxu0
      %2207 = vmatprep.mubr.bf16.mxu0 %v2053
      %2208 = vmatmul.mubr.bf16.gmra.mrb[0].mxu0 %v2005
      %v2209 = vpop.f32.mrb[0].mxu0
      %v2210 = vadd.f32 0.0, %v2209
      %v2211 = vpop.f32.mrb[0].mxu0
      %v2212 = vpop.f32.mrb[0].mxu0
      %v2213 = vadd.f32 0.0, %v2212
      %v2214 = vpop.f32.mrb[0].mxu0
      %2215 = vdwg.mxu0
      %v2216 = vsel %vm1401, %v1849, 0.0
      %v2217 = vsel %vm1402, %v1852, 0.0
      %v2218 = vsel %vm1403, %v1857, 0.0
      %v2219 = vsel %vm1404, %v1860, 0.0
      %v2220 = vsel %vm1405, %v1865, 0.0
      %v2221 = vsel %vm1406, %v1868, 0.0
      %v2222 = vsel %vm1407, %v1873, 0.0
      %v2223 = vsel %vm1408, %v1876, 0.0
      %v2224 = vsel %vm1409, %v1881, 0.0
      %v2225 = vsel %vm1410, %v1884, 0.0
      %v2226 = vsel %vm1411, %v1889, 0.0
      %v2227 = vsel %vm1412, %v1892, 0.0
      %v2228 = vsel %vm1413, %v1897, 0.0
      %v2229 = vsel %vm1414, %v1900, 0.0
      %v2230 = vsel %vm1415, %v1905, 0.0
      %v2231 = vsel %vm1416, %v1908, 0.0
      %v2232 = vsel %vm1417, %v1913, 0.0
      %v2233 = vsel %vm1418, %v1916, 0.0
      %v2234 = vsel %vm1419, %v1921, 0.0
      %v2235 = vsel %vm1420, %v1924, 0.0
      %v2236 = vsel %vm1421, %v1929, 0.0
      %v2237 = vsel %vm1422, %v1932, 0.0
      %v2238 = vsel %vm1423, %v1937, 0.0
      %v2239 = vsel %vm1424, %v1940, 0.0
      %v2240 = vsel %vm1425, %v1945, 0.0
      %v2241 = vsel %vm1426, %v1948, 0.0
      %v2242 = vsel %vm1427, %v1953, 0.0
      %v2243 = vsel %vm1428, %v1956, 0.0
      %v2244 = vsel %vm1429, %v1961, 0.0
      %v2245 = vsel %vm1430, %v1964, 0.0
      %v2246 = vsel %vm1431, %v1969, 0.0
      %v2247 = vsel %vm1432, %v1972, 0.0
      %v2248 = vsel %vm1401, %v2090, 0.0
      %v2249 = vsel %vm1402, %v2093, 0.0
      %v2250 = vsel %vm1403, %v2098, 0.0
      %v2251 = vsel %vm1404, %v2101, 0.0
      %v2252 = vsel %vm1405, %v2106, 0.0
      %v2253 = vsel %vm1406, %v2109, 0.0
      %v2254 = vsel %vm1407, %v2114, 0.0
      %v2255 = vsel %vm1408, %v2117, 0.0
      %v2256 = vsel %vm1409, %v2122, 0.0
      %v2257 = vsel %vm1410, %v2125, 0.0
      %v2258 = vsel %vm1411, %v2130, 0.0
      %v2259 = vsel %vm1412, %v2133, 0.0
      %v2260 = vsel %vm1413, %v2138, 0.0
      %v2261 = vsel %vm1414, %v2141, 0.0
      %v2262 = vsel %vm1415, %v2146, 0.0
      %v2263 = vsel %vm1416, %v2149, 0.0
      %v2264 = vsel %vm1417, %v2154, 0.0
      %v2265 = vsel %vm1418, %v2157, 0.0
      %v2266 = vsel %vm1419, %v2162, 0.0
      %v2267 = vsel %vm1420, %v2165, 0.0
      %v2268 = vsel %vm1421, %v2170, 0.0
      %v2269 = vsel %vm1422, %v2173, 0.0
      %v2270 = vsel %vm1423, %v2178, 0.0
      %v2271 = vsel %vm1424, %v2181, 0.0
      %v2272 = vsel %vm1425, %v2186, 0.0
      %v2273 = vsel %vm1426, %v2189, 0.0
      %v2274 = vsel %vm1427, %v2194, 0.0
      %v2275 = vsel %vm1428, %v2197, 0.0
      %v2276 = vsel %vm1429, %v2202, 0.0
      %v2277 = vsel %vm1430, %v2205, 0.0
      %v2278 = vsel %vm1431, %v2210, 0.0
      %v2279 = vsel %vm1432, %v2213, 0.0
      %v2280 = vld [vmem:[%s534] sm:$0x1]
      %v2281 = vadd.f32 %v2216, %v2217
      %v2282 = vadd.f32 %v2281, %v2218
      %v2283 = vadd.f32 %v2282, %v2219
      %v2284 = vadd.f32 %v2283, %v2220
      %v2285 = vadd.f32 %v2284, %v2221
      %v2286 = vadd.f32 %v2285, %v2222
      %v2287 = vadd.f32 %v2286, %v2223
      %v2288 = vadd.f32 %v2287, %v2224
      %v2289 = vadd.f32 %v2288, %v2225
      %v2290 = vadd.f32 %v2289, %v2226
      %v2291 = vadd.f32 %v2290, %v2227
      %v2292 = vadd.f32 %v2291, %v2228
      %v2293 = vadd.f32 %v2292, %v2229
      %v2294 = vadd.f32 %v2293, %v2230
      %v2295 = vadd.f32 %v2294, %v2231
      %v2296 = vadd.f32 %v2295, %v2232
      %v2297 = vadd.f32 %v2296, %v2233
      %v2298 = vadd.f32 %v2297, %v2234
      %v2299 = vadd.f32 %v2298, %v2235
      %v2300 = vadd.f32 %v2299, %v2236
      %v2301 = vadd.f32 %v2300, %v2237
      %v2302 = vadd.f32 %v2301, %v2238
      %v2303 = vadd.f32 %v2302, %v2239
      %v2304 = vadd.f32 %v2303, %v2240
      %v2305 = vadd.f32 %v2304, %v2241
      %v2306 = vadd.f32 %v2305, %v2242
      %v2307 = vadd.f32 %v2306, %v2243
      %v2308 = vadd.f32 %v2307, %v2244
      %v2309 = vadd.f32 %v2308, %v2245
      %v2310 = vadd.f32 %v2309, %v2246
      %v2311 = vadd.f32 %v2310, %v2247
      %v2312 = vrot.slane %v2311, 4
      %v2313 = vadd.f32 %v2311, %v2312
      %v2314 = vrot.slane %v2313, 2
      %v2315 = vadd.f32 %v2313, %v2314
      %v2316 = vrot.slane %v2315, 1
      %v2317 = vadd.f32 %v2315, %v2316
      %v2318 = vadd.f32 %v2280, %v2317
      %2319 = vst [vmem:[%s534] sm:$0x1] %v2318
      %v2320 = vld [vmem:[%s537] sm:$0x1]
      %v2321 = vmul.f32 %v2216, %v2216
      %v2322 = vmul.f32 %v2217, %v2217
      %v2323 = vmul.f32 %v2218, %v2218
      %v2324 = vmul.f32 %v2219, %v2219
      %v2325 = vmul.f32 %v2220, %v2220
      %v2326 = vmul.f32 %v2221, %v2221
      %v2327 = vmul.f32 %v2222, %v2222
      %v2328 = vmul.f32 %v2223, %v2223
      %v2329 = vmul.f32 %v2224, %v2224
      %v2330 = vmul.f32 %v2225, %v2225
      %v2331 = vmul.f32 %v2226, %v2226
      %v2332 = vmul.f32 %v2227, %v2227
      %v2333 = vmul.f32 %v2228, %v2228
      %v2334 = vmul.f32 %v2229, %v2229
      %v2335 = vmul.f32 %v2230, %v2230
      %v2336 = vmul.f32 %v2231, %v2231
      %v2337 = vmul.f32 %v2232, %v2232
      %v2338 = vmul.f32 %v2233, %v2233
      %v2339 = vmul.f32 %v2234, %v2234
      %v2340 = vmul.f32 %v2235, %v2235
      %v2341 = vmul.f32 %v2236, %v2236
      %v2342 = vmul.f32 %v2237, %v2237
      %v2343 = vmul.f32 %v2238, %v2238
      %v2344 = vmul.f32 %v2239, %v2239
      %v2345 = vmul.f32 %v2240, %v2240
      %v2346 = vmul.f32 %v2241, %v2241
      %v2347 = vmul.f32 %v2242, %v2242
      %v2348 = vmul.f32 %v2243, %v2243
      %v2349 = vmul.f32 %v2244, %v2244
      %v2350 = vmul.f32 %v2245, %v2245
      %v2351 = vmul.f32 %v2246, %v2246
      %v2352 = vmul.f32 %v2247, %v2247
      %v2353 = vadd.f32 %v2321, %v2322
      %v2354 = vadd.f32 %v2353, %v2323
      %v2355 = vadd.f32 %v2354, %v2324
      %v2356 = vadd.f32 %v2355, %v2325
      %v2357 = vadd.f32 %v2356, %v2326
      %v2358 = vadd.f32 %v2357, %v2327
      %v2359 = vadd.f32 %v2358, %v2328
      %v2360 = vadd.f32 %v2359, %v2329
      %v2361 = vadd.f32 %v2360, %v2330
      %v2362 = vadd.f32 %v2361, %v2331
      %v2363 = vadd.f32 %v2362, %v2332
      %v2364 = vadd.f32 %v2363, %v2333
      %v2365 = vadd.f32 %v2364, %v2334
      %v2366 = vadd.f32 %v2365, %v2335
      %v2367 = vadd.f32 %v2366, %v2336
      %v2368 = vadd.f32 %v2367, %v2337
      %v2369 = vadd.f32 %v2368, %v2338
      %v2370 = vadd.f32 %v2369, %v2339
      %v2371 = vadd.f32 %v2370, %v2340
      %v2372 = vadd.f32 %v2371, %v2341
      %v2373 = vadd.f32 %v2372, %v2342
      %v2374 = vadd.f32 %v2373, %v2343
      %v2375 = vadd.f32 %v2374, %v2344
      %v2376 = vadd.f32 %v2375, %v2345
      %v2377 = vadd.f32 %v2376, %v2346
      %v2378 = vadd.f32 %v2377, %v2347
      %v2379 = vadd.f32 %v2378, %v2348
      %v2380 = vadd.f32 %v2379, %v2349
      %v2381 = vadd.f32 %v2380, %v2350
      %v2382 = vadd.f32 %v2381, %v2351
      %v2383 = vadd.f32 %v2382, %v2352
      %v2384 = vrot.slane %v2383, 4
      %v2385 = vadd.f32 %v2383, %v2384
      %v2386 = vrot.slane %v2385, 2
      %v2387 = vadd.f32 %v2385, %v2386
      %v2388 = vrot.slane %v2387, 1
      %v2389 = vadd.f32 %v2387, %v2388
      %v2390 = vadd.f32 %v2320, %v2389
      %2391 = vst [vmem:[%s537] sm:$0x1] %v2390
      %v2392 = vld [vmem:[%s540] sm:$0x1]
      %v2393 = vadd.f32 %v2248, %v2249
      %v2394 = vadd.f32 %v2393, %v2250
      %v2395 = vadd.f32 %v2394, %v2251
      %v2396 = vadd.f32 %v2395, %v2252
      %v2397 = vadd.f32 %v2396, %v2253
      %v2398 = vadd.f32 %v2397, %v2254
      %v2399 = vadd.f32 %v2398, %v2255
      %v2400 = vadd.f32 %v2399, %v2256
      %v2401 = vadd.f32 %v2400, %v2257
      %v2402 = vadd.f32 %v2401, %v2258
      %v2403 = vadd.f32 %v2402, %v2259
      %v2404 = vadd.f32 %v2403, %v2260
      %v2405 = vadd.f32 %v2404, %v2261
      %v2406 = vadd.f32 %v2405, %v2262
      %v2407 = vadd.f32 %v2406, %v2263
      %v2408 = vadd.f32 %v2407, %v2264
      %v2409 = vadd.f32 %v2408, %v2265
      %v2410 = vadd.f32 %v2409, %v2266
      %v2411 = vadd.f32 %v2410, %v2267
      %v2412 = vadd.f32 %v2411, %v2268
      %v2413 = vadd.f32 %v2412, %v2269
      %v2414 = vadd.f32 %v2413, %v2270
      %v2415 = vadd.f32 %v2414, %v2271
      %v2416 = vadd.f32 %v2415, %v2272
      %v2417 = vadd.f32 %v2416, %v2273
      %v2418 = vadd.f32 %v2417, %v2274
      %v2419 = vadd.f32 %v2418, %v2275
      %v2420 = vadd.f32 %v2419, %v2276
      %v2421 = vadd.f32 %v2420, %v2277
      %v2422 = vadd.f32 %v2421, %v2278
      %v2423 = vadd.f32 %v2422, %v2279
      %v2424 = vrot.slane %v2423, 4
      %v2425 = vadd.f32 %v2423, %v2424
      %v2426 = vrot.slane %v2425, 2
      %v2427 = vadd.f32 %v2425, %v2426
      %v2428 = vrot.slane %v2427, 1
      %v2429 = vadd.f32 %v2427, %v2428
      %v2430 = vadd.f32 %v2392, %v2429
      %2431 = vst [vmem:[%s540] sm:$0x1] %v2430
      %v2432 = vld [vmem:[%s543] sm:$0x1]
      %v2433 = vmul.f32 %v2248, %v2248
      %v2434 = vmul.f32 %v2249, %v2249
      %v2435 = vmul.f32 %v2250, %v2250
      %v2436 = vmul.f32 %v2251, %v2251
      %v2437 = vmul.f32 %v2252, %v2252
      %v2438 = vmul.f32 %v2253, %v2253
      %v2439 = vmul.f32 %v2254, %v2254
      %v2440 = vmul.f32 %v2255, %v2255
      %v2441 = vmul.f32 %v2256, %v2256
      %v2442 = vmul.f32 %v2257, %v2257
      %v2443 = vmul.f32 %v2258, %v2258
      %v2444 = vmul.f32 %v2259, %v2259
      %v2445 = vmul.f32 %v2260, %v2260
      %v2446 = vmul.f32 %v2261, %v2261
      %v2447 = vmul.f32 %v2262, %v2262
      %v2448 = vmul.f32 %v2263, %v2263
      %v2449 = vmul.f32 %v2264, %v2264
      %v2450 = vmul.f32 %v2265, %v2265
      %v2451 = vmul.f32 %v2266, %v2266
      %v2452 = vmul.f32 %v2267, %v2267
      %v2453 = vmul.f32 %v2268, %v2268
      %v2454 = vmul.f32 %v2269, %v2269
      %v2455 = vmul.f32 %v2270, %v2270
      %v2456 = vmul.f32 %v2271, %v2271
      %v2457 = vmul.f32 %v2272, %v2272
      %v2458 = vmul.f32 %v2273, %v2273
      %v2459 = vmul.f32 %v2274, %v2274
      %v2460 = vmul.f32 %v2275, %v2275
      %v2461 = vmul.f32 %v2276, %v2276
      %v2462 = vmul.f32 %v2277, %v2277
      %v2463 = vmul.f32 %v2278, %v2278
      %v2464 = vmul.f32 %v2279, %v2279
      %v2465 = vadd.f32 %v2433, %v2434
      %v2466 = vadd.f32 %v2465, %v2435
      %v2467 = vadd.f32 %v2466, %v2436
      %v2468 = vadd.f32 %v2467, %v2437
      %v2469 = vadd.f32 %v2468, %v2438
      %v2470 = vadd.f32 %v2469, %v2439
      %v2471 = vadd.f32 %v2470, %v2440
      %v2472 = vadd.f32 %v2471, %v2441
      %v2473 = vadd.f32 %v2472, %v2442
      %v2474 = vadd.f32 %v2473, %v2443
      %v2475 = vadd.f32 %v2474, %v2444
      %v2476 = vadd.f32 %v2475, %v2445
      %v2477 = vadd.f32 %v2476, %v2446
      %v2478 = vadd.f32 %v2477, %v2447
      %v2479 = vadd.f32 %v2478, %v2448
      %v2480 = vadd.f32 %v2479, %v2449
      %v2481 = vadd.f32 %v2480, %v2450
      %v2482 = vadd.f32 %v2481, %v2451
      %v2483 = vadd.f32 %v2482, %v2452
      %v2484 = vadd.f32 %v2483, %v2453
      %v2485 = vadd.f32 %v2484, %v2454
      %v2486 = vadd.f32 %v2485, %v2455
      %v2487 = vadd.f32 %v2486, %v2456
      %v2488 = vadd.f32 %v2487, %v2457
      %v2489 = vadd.f32 %v2488, %v2458
      %v2490 = vadd.f32 %v2489, %v2459
      %v2491 = vadd.f32 %v2490, %v2460
      %v2492 = vadd.f32 %v2491, %v2461
      %v2493 = vadd.f32 %v2492, %v2462
      %v2494 = vadd.f32 %v2493, %v2463
      %v2495 = vadd.f32 %v2494, %v2464
      %v2496 = vrot.slane %v2495, 4
      %v2497 = vadd.f32 %v2495, %v2496
      %v2498 = vrot.slane %v2497, 2
      %v2499 = vadd.f32 %v2497, %v2498
      %v2500 = vrot.slane %v2499, 1
      %v2501 = vadd.f32 %v2499, %v2500
      %v2502 = vadd.f32 %v2432, %v2501
      %2503 = vst [vmem:[%s543] sm:$0x1] %v2502
      %v2504 = vld [vmem:[%s546] sm:$0x1]
      %v2505 = vmul.f32 %v2216, %v2248
      %v2506 = vmul.f32 %v2217, %v2249
      %v2507 = vmul.f32 %v2218, %v2250
      %v2508 = vmul.f32 %v2219, %v2251
      %v2509 = vmul.f32 %v2220, %v2252
      %v2510 = vmul.f32 %v2221, %v2253
      %v2511 = vmul.f32 %v2222, %v2254
      %v2512 = vmul.f32 %v2223, %v2255
      %v2513 = vmul.f32 %v2224, %v2256
      %v2514 = vmul.f32 %v2225, %v2257
      %v2515 = vmul.f32 %v2226, %v2258
      %v2516 = vmul.f32 %v2227, %v2259
      %v2517 = vmul.f32 %v2228, %v2260
      %v2518 = vmul.f32 %v2229, %v2261
      %v2519 = vmul.f32 %v2230, %v2262
      %v2520 = vmul.f32 %v2231, %v2263
      %v2521 = vmul.f32 %v2232, %v2264
      %v2522 = vmul.f32 %v2233, %v2265
      %v2523 = vmul.f32 %v2234, %v2266
      %v2524 = vmul.f32 %v2235, %v2267
      %v2525 = vmul.f32 %v2236, %v2268
      %v2526 = vmul.f32 %v2237, %v2269
      %v2527 = vmul.f32 %v2238, %v2270
      %v2528 = vmul.f32 %v2239, %v2271
      %v2529 = vmul.f32 %v2240, %v2272
      %v2530 = vmul.f32 %v2241, %v2273
      %v2531 = vmul.f32 %v2242, %v2274
      %v2532 = vmul.f32 %v2243, %v2275
      %v2533 = vmul.f32 %v2244, %v2276
      %v2534 = vmul.f32 %v2245, %v2277
      %v2535 = vmul.f32 %v2246, %v2278
      %v2536 = vmul.f32 %v2247, %v2279
      %v2537 = vadd.f32 %v2505, %v2506
      %v2538 = vadd.f32 %v2537, %v2507
      %v2539 = vadd.f32 %v2538, %v2508
      %v2540 = vadd.f32 %v2539, %v2509
      %v2541 = vadd.f32 %v2540, %v2510
      %v2542 = vadd.f32 %v2541, %v2511
      %v2543 = vadd.f32 %v2542, %v2512
      %v2544 = vadd.f32 %v2543, %v2513
      %v2545 = vadd.f32 %v2544, %v2514
      %v2546 = vadd.f32 %v2545, %v2515
      %v2547 = vadd.f32 %v2546, %v2516
      %v2548 = vadd.f32 %v2547, %v2517
      %v2549 = vadd.f32 %v2548, %v2518
      %v2550 = vadd.f32 %v2549, %v2519
      %v2551 = vadd.f32 %v2550, %v2520
      %v2552 = vadd.f32 %v2551, %v2521
      %v2553 = vadd.f32 %v2552, %v2522
      %v2554 = vadd.f32 %v2553, %v2523
      %v2555 = vadd.f32 %v2554, %v2524
      %v2556 = vadd.f32 %v2555, %v2525
      %v2557 = vadd.f32 %v2556, %v2526
      %v2558 = vadd.f32 %v2557, %v2527
      %v2559 = vadd.f32 %v2558, %v2528
      %v2560 = vadd.f32 %v2559, %v2529
      %v2561 = vadd.f32 %v2560, %v2530
      %v2562 = vadd.f32 %v2561, %v2531
      %v2563 = vadd.f32 %v2562, %v2532
      %v2564 = vadd.f32 %v2563, %v2533
      %v2565 = vadd.f32 %v2564, %v2534
      %v2566 = vadd.f32 %v2565, %v2535
      %v2567 = vadd.f32 %v2566, %v2536
      %v2568 = vrot.slane %v2567, 4
      %v2569 = vadd.f32 %v2567, %v2568
      %v2570 = vrot.slane %v2569, 2
      %v2571 = vadd.f32 %v2569, %v2570
      %v2572 = vrot.slane %v2571, 1
      %v2573 = vadd.f32 %v2571, %v2572
      %v2574 = vadd.f32 %v2504, %v2573
      %2575 = vst [vmem:[%s546] sm:$0x1] %v2574
      %p2576 = scmp.lt.s32.totalorder %s26, 1
      %s2577 = scalar_select %p2576, %s26, 1
      %s2578 = smul.addr %s2577, 2
      %s2579 = scalar_lea.vmem %s5, %s2578
      %p2580 = scmp.lt.s32.totalorder %s26, 1
      %s2581 = scalar_select %p2580, %s26, 1
      %s2582 = scalar_lea.vmem %s6, %s2581
      %p2583 = scmp.lt.s32.totalorder %s26, 1
      %s2584 = scalar_select %p2583, %s26, 1
      %s2585 = scalar_lea.vmem %s7, %s2584
      %p2586 = scmp.lt.s32.totalorder %s26, 1
      %s2587 = scalar_select %p2586, %s26, 1
      %s2588 = scalar_lea.vmem %s8, %s2587
      %p2589 = scmp.lt.s32.totalorder %s26, 1
      %s2590 = scalar_select %p2589, %s26, 1
      %s2591 = scalar_lea.vmem %s9, %s2590
      %p2592 = scmp.lt.s32.totalorder %s26, 1
      %s2593 = scalar_select %p2592, %s26, 1
      %s2594 = scalar_lea.vmem %s10, %s2593
      // Predicated region
      $region45: #{combined_forward.1} parent=39 // pred_check
        %p2595 = pneg %p183
      $region46: #{combined_forward.1} parent=39 // pred_check_branch
        %2597 = sbr.rel (%p2595) target = $region48
      $region47: #{combined_forward.1} parent=39 // pred_region
        _
      $region48: #{combined_forward.1} parent=39 // pred_fallthru
        _
      // Predicated region
      $region49: #{combined_forward.1} parent=39 // pred_check
        %p2598 = pneg %p209
      $region50: #{combined_forward.1} parent=39 // pred_check_branch
        %2600 = sbr.rel (%p2598) target = $region52
      $region51: #{combined_forward.1} parent=39 // pred_region
        _
      $region52: #{combined_forward.1} parent=39 // pred_fallthru
        _
      // Predicated region
      $region53: #{combined_forward.1} parent=39 // pred_check
        %p2601 = pneg %p235
      $region54: #{combined_forward.1} parent=39 // pred_check_branch
        %2603 = sbr.rel (%p2601) target = $region56
      $region55: #{combined_forward.1} parent=39 // pred_region
        _
      $region56: #{combined_forward.1} parent=39 // pred_fallthru
        _
      // Predicated region
      $region57: #{combined_forward.1} parent=39 // pred_check
        %p2604 = pneg %p261
      $region58: #{combined_forward.1} parent=39 // pred_check_branch
        %2606 = sbr.rel (%p2604) target = $region60
      $region59: #{combined_forward.1} parent=39 // pred_region
        _
      $region60: #{combined_forward.1} parent=39 // pred_fallthru
        _
      // Predicated region
      $region61: #{combined_forward.1} parent=39 // pred_check
        %p2607 = pneg %p287
      $region62: #{combined_forward.1} parent=39 // pred_check_branch
        %2609 = sbr.rel (%p2607) target = $region64
      $region63: #{combined_forward.1} parent=39 // pred_region
        _
      $region64: #{combined_forward.1} parent=39 // pred_fallthru
        _
      // Predicated region
      $region65: #{combined_forward.1} parent=39 // pred_check
        %p2610 = pneg %p313
      $region66: #{combined_forward.1} parent=39 // pred_check_branch
        %2612 = sbr.rel (%p2610) target = $region68
      $region67: #{combined_forward.1} parent=39 // pred_region
        _
      $region68: #{combined_forward.1} parent=39 // pred_fallthru
        _
    $region40: #{combined_forward.1} parent=5 // pred_fallthru
      _
    %p2613 = scmp.le.s32.totalorder 2, %s17
    // Predicated region
    $region69: #{combined_forward.1} parent=5 // pred_check
      %p2614 = pneg %p2613
    $region70: #{combined_forward.1} parent=5 // pred_check_branch
      %2616 = sbr.rel (%p2614) target = $region72
    $region71: #{combined_forward.1} parent=5 // pred_region
      %s2617 = ssub.s32 %s17, 2
      // Predicated region
      $region73: #{combined_forward.1} parent=71 // pred_check
        %p2618 = pneg %p189
      $region74: #{combined_forward.1} parent=71 // pred_check_branch
        %2620 = sbr.rel (%p2618) target = $region76
      $region75: #{combined_forward.1} parent=71 // pred_region
        %p2621 = scmp.lt.s32.totalorder %s28, 1
        %s2622 = scalar_select %p2621, %s28, 1
        %s2623 = smul.addr %s2622, 2
        %s2624 = scalar_lea.vmem %s5, %s2623
      $region76: #{combined_forward.1} parent=71 // pred_fallthru
        _
      // Predicated region
      $region77: #{combined_forward.1} parent=71 // pred_check
        %p2625 = pneg %p215
      $region78: #{combined_forward.1} parent=71 // pred_check_branch
        %2627 = sbr.rel (%p2625) target = $region80
      $region79: #{combined_forward.1} parent=71 // pred_region
        %p2628 = scmp.lt.s32.totalorder %s28, 1
        %s2629 = scalar_select %p2628, %s28, 1
        %s2630 = scalar_lea.vmem %s6, %s2629
      $region80: #{combined_forward.1} parent=71 // pred_fallthru
        _
      // Predicated region
      $region81: #{combined_forward.1} parent=71 // pred_check
        %p2631 = pneg %p241
      $region82: #{combined_forward.1} parent=71 // pred_check_branch
        %2633 = sbr.rel (%p2631) target = $region84
      $region83: #{combined_forward.1} parent=71 // pred_region
        %p2634 = scmp.lt.s32.totalorder %s28, 1
        %s2635 = scalar_select %p2634, %s28, 1
        %s2636 = scalar_lea.vmem %s7, %s2635
      $region84: #{combined_forward.1} parent=71 // pred_fallthru
        _
      // Predicated region
      $region85: #{combined_forward.1} parent=71 // pred_check
        %p2637 = pneg %p267
      $region86: #{combined_forward.1} parent=71 // pred_check_branch
        %2639 = sbr.rel (%p2637) target = $region88
      $region87: #{combined_forward.1} parent=71 // pred_region
        %p2640 = scmp.lt.s32.totalorder %s28, 1
        %s2641 = scalar_select %p2640, %s28, 1
        %s2642 = scalar_lea.vmem %s8, %s2641
      $region88: #{combined_forward.1} parent=71 // pred_fallthru
        _
      // Predicated region
      $region89: #{combined_forward.1} parent=71 // pred_check
        %p2643 = pneg %p293
      $region90: #{combined_forward.1} parent=71 // pred_check_branch
        %2645 = sbr.rel (%p2643) target = $region92
      $region91: #{combined_forward.1} parent=71 // pred_region
        %p2646 = scmp.lt.s32.totalorder %s28, 1
        %s2647 = scalar_select %p2646, %s28, 1
        %s2648 = scalar_lea.vmem %s9, %s2647
      $region92: #{combined_forward.1} parent=71 // pred_fallthru
        _
      // Predicated region
      $region93: #{combined_forward.1} parent=71 // pred_check
        %p2649 = pneg %p319
      $region94: #{combined_forward.1} parent=71 // pred_check_branch
        %2651 = sbr.rel (%p2649) target = $region96
      $region95: #{combined_forward.1} parent=71 // pred_region
        %p2652 = scmp.lt.s32.totalorder %s28, 1
        %s2653 = scalar_select %p2652, %s28, 1
        %s2654 = scalar_lea.vmem %s10, %s2653
      $region96: #{combined_forward.1} parent=71 // pred_fallthru
        _
    $region72: #{combined_forward.1} parent=5 // pred_fallthru
      _
  $region6: #{combined_forward.1} parent=0 // loop_footer
    %s21 = sadd.s32 1, %s17
  $region7: #{combined_forward.1} parent=0 // loop_footer_branch
    %16 = sbr.rel target = $region3
  $region8: #{combined_forward.1} parent=0 // loop_exit
    _

</llo_original>
